<compile_context>
chip_gen: v7x
topology: tpu7x:2x2x1
jax: 0.10.0
libtpu: 0.0.40
codegen_flags: <defaults>
</compile_context>

<pallas_src>
import functools

import numpy as np
import jax
import jax.numpy as jnp
from jax.experimental import pallas as pl
from jax.experimental.pallas import tpu as pltpu


# ------------------------------ Pallas kernel ------------------------------ #

def _fused_block_kernel(*refs, K, pad, n_extra, mxu_dtype):
    """One grid step = NB batch samples, whole block computed in VMEM.

    refs (in order):
      x_ref:  (NB*HP, W*Ci)   H-dilated input slabs (lane-dense rows)
      w0_ref: (K, W*Ci, Wout*Co)          banded ConvTranspose weights (per H-tap)
      wl_ref: (n_extra, K, Wout*Co, Wout*Co)  banded Conv weights   [only if n_extra>0]
      b_ref:  (n_layers, Wout*Co)         per-layer bias tiled per output column
      m_ref:  (NB*HP, 1)                  1.0 on activation rows, 0.0 on halo rows
      o_ref:  (NB*HP, Wout*Co)            output slabs (activation rows at [pad, pad+Hout))
    """
    if n_extra > 0:
        x_ref, w0_ref, wl_ref, b_ref, m_ref, o_ref = refs
    else:
        x_ref, w0_ref, b_ref, m_ref, o_ref = refs
        wl_ref = None

    f32 = jnp.float32
    mask = m_ref[...]                       # (R, 1), re-zeroes halo rows each layer

    def conv_taps(buf, w_taps, bias_row):
        # out[r] = sum_k buf[r - pad + k] @ W[k]
        # Operand-side sublane rolls (XLU) supply the H taps; the K dots then
        # accumulate back-to-back into a single f32 value (v7x MRB-friendly).
        nrows = buf.shape[0]
        acc = None
        for k in range(K):
            t = (pad - k) % nrows           # non-negative circular shift
            op = buf if t == 0 else pltpu.roll(buf, shift=t, axis=0)
            d = jnp.dot(op.astype(mxu_dtype), w_taps[k],
                        preferred_element_type=f32)
            acc = d if acc is None else acc + d
        # bias + ReLU in f32 (v5e has no bf16 VALU); mask zeroes the halo rows.
        return jnp.maximum(acc + bias_row, 0.0) * mask

    # Layer 0: ConvTranspose2d + ReLU.  x_ref already holds the H-dilated,
    # "same"-padded input slab; W-dilation/pad and kx are folded into w0.
    y = conv_taps(x_ref[...], [w0_ref[k] for k in range(K)], b_ref[0:1, :])

    # Layers 1..n_layers-1: Conv2d("same") + ReLU.  H padding == masked halo rows.
    for l in range(n_extra):
        y = conv_taps(y, [wl_ref[l, k] for k in range(K)],
                      b_ref[l + 1:l + 2, :])

    o_ref[...] = y.astype(o_ref.dtype)


def fused_deconv_block(x_slab, w0, wl, b, mask, *, K, pad, nb_rows):
    """x_slab: (N*HP, W*Ci) -> (N*HP, Wout*Co); nb_rows = NB*HP rows per grid step."""
    R, WCi = x_slab.shape
    Wco = w0.shape[-1]
    n_extra = 0 if wl is None else wl.shape[0]
    mxu_dtype = w0.dtype

    kernel = functools.partial(_fused_block_kernel, K=K, pad=pad,
                               n_extra=n_extra, mxu_dtype=mxu_dtype)

    in_specs = [pl.BlockSpec((nb_rows, WCi), lambda n: (n, 0)),
                pl.BlockSpec(w0.shape, lambda n: (0,) * w0.ndim)]   # constant block
    args = [x_slab, w0]
    if n_extra > 0:                                   # skip dummy wl when n_layers==1
        in_specs.append(pl.BlockSpec(wl.shape, lambda n: (0,) * wl.ndim))
        args.append(wl)
    in_specs += [pl.BlockSpec(b.shape, lambda n: (0, 0)),
                 pl.BlockSpec(mask.shape, lambda n: (0, 0))]
    args += [b, mask]

    return pl.pallas_call(
        kernel,
        out_shape=jax.ShapeDtypeStruct((R, Wco), jnp.float32),
        grid=(R // nb_rows,),
        in_specs=in_specs,
        out_specs=pl.BlockSpec((nb_rows, Wco), lambda n: (n, 0)),
        compiler_params=pltpu.CompilerParams(
            dimension_semantics=("parallel",)),       # batch-block axis -> megacore
    )(*args)


# --------------------------- one-time weight packing ------------------------ #

def pack_params(params, *, kernel_size, stride, H, W, output_padding=1,
                mxu_dtype=jnp.float32):
    """Exact re-layout of torch-layout weights into banded-matmul form.

    The packed matrices are specialized to the input spatial size (H, W), the
    same way a jitted forward is shape-specialized.
    """
    K, s, pad = kernel_size, stride, kernel_size // 2
    assert output_padding < s, "PyTorch requires output_padding < stride"
    f32 = jnp.float32

    wt, bt = params["deconv"]                 # wt: (Ci, Co, K, K) torch ConvTranspose2d
    Ci, Co = wt.shape[0], wt.shape[1]

    p_lo = K - 1 - pad
    p_hi = K - 1 - pad + output_padding
    Hdp = (H - 1) * s + 1 + p_lo + p_hi
    Wdp = (W - 1) * s + 1 + p_lo + p_hi
    Hout, Wout = Hdp - K + 1, Wdp - K + 1
    HP = ((Hdp + 7) // 8) * 8                 # per-sample slab pitch, (8,·)-aligned

    # ConvTranspose2d == VALID correlation of the zero-dilated, padded input with
    # the spatially flipped, channel-swapped kernel.
    wf = jnp.transpose(wt[:, :, ::-1, ::-1], (2, 3, 0, 1)).astype(f32)   # (K,K,Ci,Co)

    # Banded deconv weights with W-dilation/pad folded in (sw-fold, exact 0/1):
    # w0[ky, j*Ci+ci, ox*Co+co] = wf[ky, p_lo + s*j - ox, ci, co]  (kx in range)
    jj = np.arange(W)[:, None, None]
    kk = np.arange(K)[None, :, None]
    oo = np.arange(Wout)[None, None, :]
    B0 = np.asarray((p_lo + s * jj - oo) == kk, dtype=np.float32)        # (W,K,Wout)
    w0 = jnp.einsum("jko,akcd->ajcod", B0, wf).reshape(K, W * Ci, Wout * Co)
    biases = [jnp.tile(bt.astype(f32), Wout)]

    # Banded "same"-conv weights for the extra layers; W padding folded in:
    # wl[ky, m*Co+c, o*Co+d] = w[d, c, ky, m - o + pad]  (kx in range)
    mm = np.arange(Wout)[:, None, None]
    oo2 = np.arange(Wout)[None, None, :]
    Bl = np.asarray((mm - oo2 + pad) == kk, dtype=np.float32)            # (Wout,K,Wout)
    wls = []
    for (w, b) in params["convs"]:                      # w: (Co, Ci, K, K) OIHW
        wkk = jnp.transpose(w, (2, 3, 1, 0)).astype(f32)                 # (K,K,Ci,Co)
        wls.append(jnp.einsum("mxo,axcd->amcod", Bl,
                              wkk).reshape(K, Wout * Co, Wout * Co))
        biases.append(jnp.tile(b.astype(f32), Wout))
    wl = jnp.stack(wls).astype(mxu_dtype) if wls else None

    packed = {"w0": w0.astype(mxu_dtype), "wl": wl, "b": jnp.stack(biases)}
    meta = {"K": K, "stride": s, "pad": pad, "p_lo": p_lo, "H": H, "W": W,
            "Ci": Ci, "Co": Co, "Hout": Hout, "Wout": Wout, "HP": HP}
    return packed, meta


# --------------------------- block forward (glue) --------------------------- #

def _pick_batch_block(N, HP, target_rows=256):
    """Largest divisor of N with NB*HP <= target M; prefer an even grid (v7x)."""
    divisors = [d for d in range(1, N + 1) if N % d == 0]
    fits = [d for d in divisors if d * HP <= max(HP, target_rows)]
    even_grid = [d for d in fits if (N // d) % 2 == 0]
    return max(even_grid) if even_grid else max(fits)


def deconv_block_forward(x_nchw, packed, *, meta, batch_block=None):
    """Matches torch DeconvolutionalBlock.forward.  Input/output are NCHW."""
    K, s, pad, p_lo = meta["K"], meta["stride"], meta["pad"], meta["p_lo"]
    H, W, Ci, Co = meta["H"], meta["W"], meta["Ci"], meta["Co"]
    Hout, Wout, HP = meta["Hout"], meta["Wout"], meta["HP"]
    N = x_nchw.shape[0]
    assert x_nchw.shape[1:] == (Ci, H, W)

    nb = batch_block or _pick_batch_block(N, HP)
    assert N % nb == 0

    # Lane-dense rows (rows = H, lanes = W*Ci), then scatter into the H-dilated
    # per-sample slab (pitch HP, data at rows p_lo + s*i).  Pure layout plumbing
    # done once per call in XLA; only ~2x the tiny input bytes touch HBM.
    x_rows = jnp.transpose(x_nchw, (0, 2, 3, 1)).reshape(N, H, W * Ci)
    x_slab = jnp.zeros((N, HP, W * Ci), x_rows.dtype)
    x_slab = x_slab.at[:, p_lo:p_lo + s * (H - 1) + 1:s, :].set(x_rows)
    x_slab = x_slab.reshape(N * HP, W * Ci)

    # 1.0 on activation rows [pad, pad+Hout), 0.0 on halo/tail rows.
    row = np.arange(nb * HP) % HP
    mask = jnp.asarray(((row >= pad) & (row < pad + Hout))
                       .astype(np.float32)[:, None])

    y_full = fused_deconv_block(x_slab, packed["w0"], packed["wl"], packed["b"],
                                mask, K=K, pad=pad, nb_rows=nb * HP)

    y = y_full.reshape(N, HP, Wout * Co)[:, pad:pad + Hout, :]
    return jnp.transpose(y.reshape(N, Hout, Wout, Co), (0, 3, 1, 2))


# ------------------------------ XLA reference ------------------------------- #

def reference_forward(x_nchw, params, *, kernel_size, stride):
    K = kernel_size
    pad = K // 2
    out_pad = 1
    wt, bt = params["deconv"]
    w_oihw = jnp.transpose(wt[:, :, ::-1, ::-1], (1, 0, 2, 3))
    y = jax.lax.conv_general_dilated(
        x_nchw, w_oihw, window_strides=(1, 1),
        padding=[(K - 1 - pad, K - 1 - pad + out_pad)] * 2,
        lhs_dilation=(stride, stride),
        dimension_numbers=("NCHW", "OIHW", "NCHW"))
    y = jax.nn.relu(y + bt[None, :, None, None])
    for (w, b) in params["convs"]:
        y = jax.lax.conv_general_dilated(
            y, w, window_strides=(1, 1), padding=[(pad, pad)] * 2,
            dimension_numbers=("NCHW", "OIHW", "NCHW"))
        y = jax.nn.relu(y + b[None, :, None, None])
    return y


# ----------------------------------- main ----------------------------------- #

if __name__ == "__main__":
    # DeconvolutionalBlock(input_channels=4, n_filters=8, kernel_size=3,
    #                      n_layers=2, stride=2) on x: (4, 4, 16, 16)
    N, Cin, H, W = 4, 4, 16, 16
    n_filters, K, n_layers, stride = 8, 3, 2, 2

    key = jax.random.PRNGKey(0)
    k_x, k_wt, k_bt, k_rest = jax.random.split(key, 4)
    x = jax.random.normal(k_x, (N, Cin, H, W), jnp.float32)

    # Deterministic synthetic parameters (torch layouts).
    wt = 0.1 * jax.random.normal(k_wt, (Cin, n_filters, K, K), jnp.float32)
    bt = 0.1 * jax.random.normal(k_bt, (n_filters,), jnp.float32)
    convs = []
    if n_layers > 1:
        ks = jax.random.split(k_rest, 2 * (n_layers - 1))
        for l in range(n_layers - 1):
            w = 0.1 * jax.random.normal(ks[2 * l], (n_filters, n_filters, K, K),
                                        jnp.float32)
            b = 0.1 * jax.random.normal(ks[2 * l + 1], (n_filters,), jnp.float32)
            convs.append((w, b))
    params = {"deconv": (wt, bt), "convs": convs}

    y_ref = jax.block_until_ready(
        reference_forward(x, params, kernel_size=K, stride=stride))

    # Exact (f32 MXU operand) build.
    packed32, meta = pack_params(params, kernel_size=K, stride=stride, H=H, W=W,
                                 mxu_dtype=jnp.float32)
    fwd32 = jax.jit(functools.partial(deconv_block_forward, meta=meta))
    y32 = jax.block_until_ready(fwd32(x, packed32))
    assert y32.shape == (N, n_filters, stride * H, stride * W), y32.shape
    np.testing.assert_allclose(np.asarray(y32), np.asarray(y_ref),
                               atol=1e-4, rtol=1e-4)

    # bf16 MXU-operand build (native MXU rate on v5e/v6e/v7x); f32 accumulation
    # and f32 bias/ReLU epilogue, so only operand rounding differs.
    packed16, _ = pack_params(params, kernel_size=K, stride=stride, H=H, W=W,
                              mxu_dtype=jnp.bfloat16)
    fwd16 = jax.jit(functools.partial(deconv_block_forward, meta=meta))
    y16 = jax.block_until_ready(fwd16(x, packed16))
    np.testing.assert_allclose(np.asarray(y16), np.asarray(y_ref),
                               atol=5e-2, rtol=5e-2)

    print("KERNEL_OK")
</pallas_src>

<mosaic_0001>
module attributes {stable_mosaic.version = 11 : i64} {
  func.func @_fused_block_kernel(%arg0: i32, %arg1: memref<80x64xf32, #tpu.memory_space<vmem>>, %arg2: memref<3x64x256xf32, #tpu.memory_space<vmem>>, %arg3: memref<1x3x256x256xf32, #tpu.memory_space<vmem>>, %arg4: memref<2x256xf32, #tpu.memory_space<vmem>>, %arg5: memref<80x1xf32, #tpu.memory_space<vmem>>, %arg6: memref<80x256xf32, #tpu.memory_space<vmem>>) attributes {dimension_semantics = [#tpu.dimension_semantics<parallel>], iteration_bounds = array<i64: 2>, scalar_prefetch = 0 : i64, scratch_operands = 0 : i64, tpu.core_type = #tpu.core_type<tc>, window_params = [{transform_indices = @transform_0, window_bounds = array<i64: 80, 64>}, {pipeline_mode = #tpu.pipeline_mode<synchronous>, transform_indices = @transform_1, window_bounds = array<i64: 3, 64, 256>}, {pipeline_mode = #tpu.pipeline_mode<synchronous>, transform_indices = @transform_2, window_bounds = array<i64: 1, 3, 256, 256>}, {pipeline_mode = #tpu.pipeline_mode<synchronous>, transform_indices = @transform_3, window_bounds = array<i64: 2, 256>}, {pipeline_mode = #tpu.pipeline_mode<synchronous>, transform_indices = @transform_4, window_bounds = array<i64: 80, 1>}, {transform_indices = @transform_5, window_bounds = array<i64: 80, 256>}]} {
    %c0 = arith.constant 0 : index
    %c0_0 = arith.constant 0 : index
    %0 = vector.load %arg5[%c0, %c0_0] : memref<80x1xf32, #tpu.memory_space<vmem>>, vector<80x1xf32>
    %c0_1 = arith.constant 0 : index
    %c0_2 = arith.constant 0 : index
    %1 = vector.load %arg1[%c0_1, %c0_2] : memref<80x64xf32, #tpu.memory_space<vmem>>, vector<80x64xf32>
    %c0_3 = arith.constant 0 : index
    %c0_4 = arith.constant 0 : index
    %c0_5 = arith.constant 0 : index
    %2 = vector.load %arg2[%c0_3, %c0_4, %c0_5] : memref<3x64x256xf32, #tpu.memory_space<vmem>>, vector<1x64x256xf32>
    %3 = vector.shape_cast %2 : vector<1x64x256xf32> to vector<64x256xf32>
    %c1 = arith.constant 1 : index
    %c0_6 = arith.constant 0 : index
    %c0_7 = arith.constant 0 : index
    %4 = vector.load %arg2[%c1, %c0_6, %c0_7] : memref<3x64x256xf32, #tpu.memory_space<vmem>>, vector<1x64x256xf32>
    %5 = vector.shape_cast %4 : vector<1x64x256xf32> to vector<64x256xf32>
    %c2 = arith.constant 2 : index
    %c0_8 = arith.constant 0 : index
    %c0_9 = arith.constant 0 : index
    %6 = vector.load %arg2[%c2, %c0_8, %c0_9] : memref<3x64x256xf32, #tpu.memory_space<vmem>>, vector<1x64x256xf32>
    %7 = vector.shape_cast %6 : vector<1x64x256xf32> to vector<64x256xf32>
    %c0_10 = arith.constant 0 : index
    %c0_11 = arith.constant 0 : index
    %8 = vector.load %arg4[%c0_10, %c0_11] : memref<2x256xf32, #tpu.memory_space<vmem>>, vector<1x256xf32>
    %c1_i32 = arith.constant 1 : i32
    %9 = tpu.dynamic_rotate %1 by %c1_i32 dim 0 : vector<80x64xf32>, i32 -> vector<80x64xf32>
    %cst = arith.constant dense<0.000000e+00> : vector<80x256xf32>
    %10 = tpu.matmul %9, %3, %cst {dimension_numbers = #tpu.dot_dimension_numbers<[1], [0], [0], [1], [0, 0, 1, 1], [], []>} : vector<80x64xf32>, vector<64x256xf32>, vector<80x256xf32> -> vector<80x256xf32>
    %cst_12 = arith.constant dense<0.000000e+00> : vector<80x256xf32>
    %11 = tpu.matmul %1, %5, %cst_12 {dimension_numbers = #tpu.dot_dimension_numbers<[1], [0], [0], [1], [0, 0, 1, 1], [], []>} : vector<80x64xf32>, vector<64x256xf32>, vector<80x256xf32> -> vector<80x256xf32>
    %12 = arith.addf %10, %11 : vector<80x256xf32>
    %c79_i32 = arith.constant 79 : i32
    %13 = tpu.dynamic_rotate %1 by %c79_i32 dim 0 : vector<80x64xf32>, i32 -> vector<80x64xf32>
    %cst_13 = arith.constant dense<0.000000e+00> : vector<80x256xf32>
    %14 = tpu.matmul %13, %7, %cst_13 {dimension_numbers = #tpu.dot_dimension_numbers<[1], [0], [0], [1], [0, 0, 1, 1], [], []>} : vector<80x64xf32>, vector<64x256xf32>, vector<80x256xf32> -> vector<80x256xf32>
    %15 = arith.addf %12, %14 : vector<80x256xf32>
    %16 = vector.broadcast %8 : vector<1x256xf32> to vector<80x256xf32>
    %17 = arith.addf %15, %16 : vector<80x256xf32>
    %cst_14 = arith.constant 0.000000e+00 : f32
    %18 = vector.broadcast %cst_14 : f32 to vector<80x256xf32>
    %19 = arith.maximumf %17, %18 : vector<80x256xf32>
    %20 = vector.broadcast %0 : vector<80x1xf32> to vector<80x256xf32>
    %21 = arith.mulf %19, %20 : vector<80x256xf32>
    %c0_15 = arith.constant 0 : index
    %c0_16 = arith.constant 0 : index
    %c0_17 = arith.constant 0 : index
    %c0_18 = arith.constant 0 : index
    %22 = vector.load %arg3[%c0_15, %c0_16, %c0_17, %c0_18] : memref<1x3x256x256xf32, #tpu.memory_space<vmem>>, vector<1x1x256x256xf32>
    %23 = vector.shape_cast %22 : vector<1x1x256x256xf32> to vector<256x256xf32>
    %c0_19 = arith.constant 0 : index
    %c1_20 = arith.constant 1 : index
    %c0_21 = arith.constant 0 : index
    %c0_22 = arith.constant 0 : index
    %24 = vector.load %arg3[%c0_19, %c1_20, %c0_21, %c0_22] : memref<1x3x256x256xf32, #tpu.memory_space<vmem>>, vector<1x1x256x256xf32>
    %25 = vector.shape_cast %24 : vector<1x1x256x256xf32> to vector<256x256xf32>
    %c0_23 = arith.constant 0 : index
    %c2_24 = arith.constant 2 : index
    %c0_25 = arith.constant 0 : index
    %c0_26 = arith.constant 0 : index
    %26 = vector.load %arg3[%c0_23, %c2_24, %c0_25, %c0_26] : memref<1x3x256x256xf32, #tpu.memory_space<vmem>>, vector<1x1x256x256xf32>
    %27 = vector.shape_cast %26 : vector<1x1x256x256xf32> to vector<256x256xf32>
    %c1_27 = arith.constant 1 : index
    %c0_28 = arith.constant 0 : index
    %28 = vector.load %arg4[%c1_27, %c0_28] : memref<2x256xf32, #tpu.memory_space<vmem>>, vector<1x256xf32>
    %c1_i32_29 = arith.constant 1 : i32
    %29 = tpu.dynamic_rotate %21 by %c1_i32_29 dim 0 : vector<80x256xf32>, i32 -> vector<80x256xf32>
    %cst_30 = arith.constant dense<0.000000e+00> : vector<80x256xf32>
    %30 = tpu.matmul %29, %23, %cst_30 {dimension_numbers = #tpu.dot_dimension_numbers<[1], [0], [0], [1], [0, 0, 1, 1], [], []>} : vector<80x256xf32>, vector<256x256xf32>, vector<80x256xf32> -> vector<80x256xf32>
    %cst_31 = arith.constant dense<0.000000e+00> : vector<80x256xf32>
    %31 = tpu.matmul %21, %25, %cst_31 {dimension_numbers = #tpu.dot_dimension_numbers<[1], [0], [0], [1], [0, 0, 1, 1], [], []>} : vector<80x256xf32>, vector<256x256xf32>, vector<80x256xf32> -> vector<80x256xf32>
    %32 = arith.addf %30, %31 : vector<80x256xf32>
    %c79_i32_32 = arith.constant 79 : i32
    %33 = tpu.dynamic_rotate %21 by %c79_i32_32 dim 0 : vector<80x256xf32>, i32 -> vector<80x256xf32>
    %cst_33 = arith.constant dense<0.000000e+00> : vector<80x256xf32>
    %34 = tpu.matmul %33, %27, %cst_33 {dimension_numbers = #tpu.dot_dimension_numbers<[1], [0], [0], [1], [0, 0, 1, 1], [], []>} : vector<80x256xf32>, vector<256x256xf32>, vector<80x256xf32> -> vector<80x256xf32>
    %35 = arith.addf %32, %34 : vector<80x256xf32>
    %36 = vector.broadcast %28 : vector<1x256xf32> to vector<80x256xf32>
    %37 = arith.addf %35, %36 : vector<80x256xf32>
    %cst_34 = arith.constant 0.000000e+00 : f32
    %38 = vector.broadcast %cst_34 : f32 to vector<80x256xf32>
    %39 = arith.maximumf %37, %38 : vector<80x256xf32>
    %40 = vector.broadcast %0 : vector<80x1xf32> to vector<80x256xf32>
    %41 = arith.mulf %39, %40 : vector<80x256xf32>
    %c0_35 = arith.constant 0 : index
    %c0_36 = arith.constant 0 : index
    %42 = vector.load %arg6[%c0_35, %c0_36] : memref<80x256xf32, #tpu.memory_space<vmem>>, vector<80x256xf32>
    tpu.vector_store %arg6[%c0_35, %c0_36], %41 {strides = array<i32>} : memref<80x256xf32, #tpu.memory_space<vmem>>, vector<80x256xf32>,
    return
  }
  func.func @transform_0(%arg0: i32) -> (i32, i32) {
    %c0_i32 = arith.constant 0 : i32
    %c0_i32_0 = arith.constant 0 : i32
    return %arg0, %c0_i32 : i32, i32
  }
  func.func @transform_1(%arg0: i32) -> (i32, i32, i32) {
    %c0_i32 = arith.constant 0 : i32
    %c0_i32_0 = arith.constant 0 : i32
    %c0_i32_1 = arith.constant 0 : i32
    %c0_i32_2 = arith.constant 0 : i32
    return %c0_i32, %c0_i32_0, %c0_i32_1 : i32, i32, i32
  }
  func.func @transform_2(%arg0: i32) -> (i32, i32, i32, i32) {
    %c0_i32 = arith.constant 0 : i32
    %c0_i32_0 = arith.constant 0 : i32
    %c0_i32_1 = arith.constant 0 : i32
    %c0_i32_2 = arith.constant 0 : i32
    %c0_i32_3 = arith.constant 0 : i32
    return %c0_i32, %c0_i32_0, %c0_i32_1, %c0_i32_2 : i32, i32, i32, i32
  }
  func.func @transform_3(%arg0: i32) -> (i32, i32) {
    %c0_i32 = arith.constant 0 : i32
    %c0_i32_0 = arith.constant 0 : i32
    %c0_i32_1 = arith.constant 0 : i32
    return %c0_i32, %c0_i32_0 : i32, i32
  }
  func.func @transform_4(%arg0: i32) -> (i32, i32) {
    %c0_i32 = arith.constant 0 : i32
    %c0_i32_0 = arith.constant 0 : i32
    %c0_i32_1 = arith.constant 0 : i32
    return %c0_i32, %c0_i32_0 : i32, i32
  }
  func.func @transform_5(%arg0: i32) -> (i32, i32) {
    %c0_i32 = arith.constant 0 : i32
    %c0_i32_0 = arith.constant 0 : i32
    return %arg0, %c0_i32 : i32, i32
  }
}

</mosaic_0001>

<llo_original>
// kernel: deconv_block_forward.1
$region0: #{deconv_block_forward.1}
  #allocation0 [shape = 'u32[]', space=smem, size = 0x4, offset = 0x4, fixed_abs, tag = 'smem constant byte address 0x4 - core index']
  #allocation1 [shape = 'u32[144,128]{1,0:T(1,128)}', space=vmem, size = 0x12000, scoped, tag = 'internal scratch']
  %s0 = inlined_call_operand.vmem [shape: f32[160,64], index: 0, kind: input, shape index: {}]
  %s1 = inlined_call_operand.vmem [shape: f32[3,64,256], index: 1, kind: input, shape index: {}]
  %s2 = inlined_call_operand.hbm [shape: f32[1,3,256,256], index: 2, kind: input, shape index: {}]
  %s3 = inlined_call_operand.vmem [shape: f32[2,256], index: 3, kind: input, shape index: {}]
  %s4 = inlined_call_operand.vmem [shape: f32[80,1], index: 4, kind: input, shape index: {}]
  %s5 = inlined_call_operand.vmem [shape: f32[160,256], index: 5, kind: output, shape index: {}]
  %s6 = sld [smem:[#allocation0]]
  $region57: #{deconv_block_forward.1} parent=0
    _
  %s8 = ssub.s32 1, %s6
  %s9 = scalar_select 0, %s8, %s6
  $region1: #{deconv_block_forward.1} parent=0
    #allocation2 [shape = 'u8[786432]{0}', space=vmem, size = 0xc0000, scoped, tag = 'input window, operand 2, single buffered']
    #allocation3 [shape = 's32[2]{0}', space=sflag, size = 0x8, scoped, tag = 'scoped memory for deconv_block_forward.1']
    %10 = vsyncpa [#allocation3], 0
    loop: start=0, step=1, limit=4
    $region2: #{deconv_block_forward.1} parent=1 // loop_pre_header
      _
    $region3: #{deconv_block_forward.1} parent=1 // loop_header
      %s12 = sphi 0, %s16
      %p13 = scmp.ge.s32.totalorder %s12, 4
      %s22 = sphi 0, %s24
      %s25 = sphi 0, %s22
      %s26 = sphi 0, %s25
      %s42 = sphi 0, %s26
      %s46 = sphi 0, %s46
      %s48 = sphi 0, %s46
      %s49 = sphi 0, %s48
      %s63 = sphi 0, %s49
      %s67 = sphi 0, %s67
      %s69 = sphi 0, %s67
      %s70 = sphi 0, %s69
      %s84 = sphi 0, %s70
      %s88 = sphi 0, %s88
      %s90 = sphi 0, %s88
      %s91 = sphi 0, %s90
      %s105 = sphi 0, %s91
      %s109 = sphi 0, %s109
      %s111 = sphi 0, %s109
      %s112 = sphi 0, %s111
      %s126 = sphi 0, %s112
      %s132 = sphi 0, %s134
      %s135 = sphi 0, %s132
      %s136 = sphi 0, %s135
      %s152 = sphi 0, %s136
    $region4: #{deconv_block_forward.1} parent=1 // loop_header_branch
      %15 = sbr.rel (%p13) target = $region8
    $region5: #{deconv_block_forward.1} parent=1 // loop_body
      %s17 = ssub.s32 %s12, 1
      %s18 = ssub.s32 %s12, 2
      %s19 = sadd.s32 %s12, 1
      %s20 = ssub.s32 %s12, %s19
      %p21 = scmp.eq.s32.totalorder %s20, 0
      %s23 = sadd.s32 %s22, 1
      %s24 = scalar_select %p21, %s22, %s23
      %p27 = pneg %p21
      %p28 = scmp.eq.s32.totalorder %s12, 1
      %p29 = por %p27, %p28
      %p30 = scmp.ne.s32.totalorder %s22, %s25
      %p31 = scmp.eq.s32.totalorder %s12, 0
      %p32 = por %p30, %p31
      %p33 = scmp.ne.s32.totalorder %s22, %s25
      %p34 = scmp.eq.s32.totalorder %s17, 1
      %p35 = por %p33, %p34
      %p36 = scmp.ne.s32.totalorder %s25, %s26
      %p37 = scmp.eq.s32.totalorder %s17, 0
      %p38 = por %p36, %p37
      %p39 = scmp.ne.s32.totalorder %s25, %s26
      %p40 = scmp.eq.s32.totalorder %s18, 1
      %p41 = por %p39, %p40
      %p43 = scmp.ne.s32.totalorder %s26, %s42
      %p44 = scmp.eq.s32.totalorder %s18, 0
      %p45 = por %p43, %p44
      %s47 = sadd.s32 %s46, 1
      %p50 = scmp.eq.s32.totalorder %s12, 1
      %p51 = scmp.ne.s32.totalorder %s46, %s48
      %p52 = scmp.eq.s32.totalorder %s12, 0
      %p53 = por %p51, %p52
      %p54 = scmp.ne.s32.totalorder %s46, %s48
      %p55 = scmp.eq.s32.totalorder %s17, 1
      %p56 = por %p54, %p55
      %p57 = scmp.ne.s32.totalorder %s48, %s49
      %p58 = scmp.eq.s32.totalorder %s17, 0
      %p59 = por %p57, %p58
      %p60 = scmp.ne.s32.totalorder %s48, %s49
      %p61 = scmp.eq.s32.totalorder %s18, 1
      %p62 = por %p60, %p61
      %p64 = scmp.ne.s32.totalorder %s49, %s63
      %p65 = scmp.eq.s32.totalorder %s18, 0
      %p66 = por %p64, %p65
      %s68 = sadd.s32 %s67, 1
      %p71 = scmp.eq.s32.totalorder %s12, 1
      %p72 = scmp.ne.s32.totalorder %s67, %s69
      %p73 = scmp.eq.s32.totalorder %s12, 0
      %p74 = por %p72, %p73
      %p75 = scmp.ne.s32.totalorder %s67, %s69
      %p76 = scmp.eq.s32.totalorder %s17, 1
      %p77 = por %p75, %p76
      %p78 = scmp.ne.s32.totalorder %s69, %s70
      %p79 = scmp.eq.s32.totalorder %s17, 0
      %p80 = por %p78, %p79
      %p81 = scmp.ne.s32.totalorder %s69, %s70
      %p82 = scmp.eq.s32.totalorder %s18, 1
      %p83 = por %p81, %p82
      %p85 = scmp.ne.s32.totalorder %s70, %s84
      %p86 = scmp.eq.s32.totalorder %s18, 0
      %p87 = por %p85, %p86
      %s89 = sadd.s32 %s88, 1
      %p92 = scmp.eq.s32.totalorder %s12, 1
      %p93 = scmp.ne.s32.totalorder %s88, %s90
      %p94 = scmp.eq.s32.totalorder %s12, 0
      %p95 = por %p93, %p94
      %p96 = scmp.ne.s32.totalorder %s88, %s90
      %p97 = scmp.eq.s32.totalorder %s17, 1
      %p98 = por %p96, %p97
      %p99 = scmp.ne.s32.totalorder %s90, %s91
      %p100 = scmp.eq.s32.totalorder %s17, 0
      %p101 = por %p99, %p100
      %p102 = scmp.ne.s32.totalorder %s90, %s91
      %p103 = scmp.eq.s32.totalorder %s18, 1
      %p104 = por %p102, %p103
      %p106 = scmp.ne.s32.totalorder %s91, %s105
      %p107 = scmp.eq.s32.totalorder %s18, 0
      %p108 = por %p106, %p107
      %s110 = sadd.s32 %s109, 1
      %p113 = scmp.eq.s32.totalorder %s12, 1
      %p114 = scmp.ne.s32.totalorder %s109, %s111
      %p115 = scmp.eq.s32.totalorder %s12, 0
      %p116 = por %p114, %p115
      %p117 = scmp.ne.s32.totalorder %s109, %s111
      %p118 = scmp.eq.s32.totalorder %s17, 1
      %p119 = por %p117, %p118
      %p120 = scmp.ne.s32.totalorder %s111, %s112
      %p121 = scmp.eq.s32.totalorder %s17, 0
      %p122 = por %p120, %p121
      %p123 = scmp.ne.s32.totalorder %s111, %s112
      %p124 = scmp.eq.s32.totalorder %s18, 1
      %p125 = por %p123, %p124
      %p127 = scmp.ne.s32.totalorder %s112, %s126
      %p128 = scmp.eq.s32.totalorder %s18, 0
      %p129 = por %p127, %p128
      %s130 = ssub.s32 %s12, %s19
      %p131 = scmp.eq.s32.totalorder %s130, 0
      %s133 = sadd.s32 %s132, 1
      %s134 = scalar_select %p131, %s132, %s133
      %p137 = pneg %p131
      %p138 = scmp.eq.s32.totalorder %s12, 1
      %p139 = por %p137, %p138
      %p140 = scmp.ne.s32.totalorder %s132, %s135
      %p141 = scmp.eq.s32.totalorder %s12, 0
      %p142 = por %p140, %p141
      %p143 = scmp.ne.s32.totalorder %s132, %s135
      %p144 = scmp.eq.s32.totalorder %s17, 1
      %p145 = por %p143, %p144
      %p146 = scmp.ne.s32.totalorder %s135, %s136
      %p147 = scmp.eq.s32.totalorder %s17, 0
      %p148 = por %p146, %p147
      %p149 = scmp.ne.s32.totalorder %s135, %s136
      %p150 = scmp.eq.s32.totalorder %s18, 1
      %p151 = por %p149, %p150
      %p153 = scmp.ne.s32.totalorder %s136, %s152
      %p154 = scmp.eq.s32.totalorder %s18, 0
      %p155 = por %p153, %p154
      %p156 = scmp.le.s32.totalorder 1, %s12
      %p157 = scmp.lt.s32.totalorder %s12, 3
      %p158 = pnand %p156, %p157
      %p159 = pneg %p158
      // Predicated region
      $region9: #{deconv_block_forward.1} parent=5 // pred_check
        _
      $region10: #{deconv_block_forward.1} parent=5 // pred_check_branch
        %161 = sbr.rel (%p158) target = $region12
      $region11: #{deconv_block_forward.1} parent=5 // pred_region
        %s162 = ssub.s32 %s12, 1
        // Predicated region
        $region13: #{deconv_block_forward.1} parent=11 // pred_check
          %p163 = pneg %p59
        $region14: #{deconv_block_forward.1} parent=11 // pred_check_branch
          %165 = sbr.rel (%p163) target = $region16
        $region15: #{deconv_block_forward.1} parent=11 // pred_region
          _
        $region16: #{deconv_block_forward.1} parent=11 // pred_fallthru
          _
        // Predicated region
        $region17: #{deconv_block_forward.1} parent=11 // pred_check
          %p166 = pneg %p80
        $region18: #{deconv_block_forward.1} parent=11 // pred_check_branch
          %168 = sbr.rel (%p166) target = $region20
        $region19: #{deconv_block_forward.1} parent=11 // pred_region
          %s170 = ssub.s32 24576, 24576
          %171 = vsyncadd [#allocation3], %s170
          %s172 = sshll.u32 [#allocation2], 4
          %s173 = int_to_ptr.vmem [resolvable:$true] %s172
          %178 = dma.hbm_to_vmem [thread:$0]  %s2, 24576, %s173, [#allocation3], 256, 256, 16
        $region20: #{deconv_block_forward.1} parent=11 // pred_fallthru
          _
        // Predicated region
        $region21: #{deconv_block_forward.1} parent=11 // pred_check
          %p179 = pneg %p101
        $region22: #{deconv_block_forward.1} parent=11 // pred_check_branch
          %181 = sbr.rel (%p179) target = $region24
        $region23: #{deconv_block_forward.1} parent=11 // pred_region
          _
        $region24: #{deconv_block_forward.1} parent=11 // pred_fallthru
          _
        // Predicated region
        $region25: #{deconv_block_forward.1} parent=11 // pred_check
          %p182 = pneg %p122
        $region26: #{deconv_block_forward.1} parent=11 // pred_check_branch
          %184 = sbr.rel (%p182) target = $region28
        $region27: #{deconv_block_forward.1} parent=11 // pred_region
          _
        $region28: #{deconv_block_forward.1} parent=11 // pred_fallthru
          _
      $region12: #{deconv_block_forward.1} parent=5 // pred_fallthru
        _
      %p185 = scmp.lt.s32.totalorder %s12, 2
      // Predicated region
      $region29: #{deconv_block_forward.1} parent=5 // pred_check
        %p186 = pneg %p185
      $region30: #{deconv_block_forward.1} parent=5 // pred_check_branch
        %188 = sbr.rel (%p186) target = $region32
      $region31: #{deconv_block_forward.1} parent=5 // pred_region
        // Predicated region
        $region33: #{deconv_block_forward.1} parent=31 // pred_check
          %p189 = pneg %p32
        $region34: #{deconv_block_forward.1} parent=31 // pred_check_branch
          %191 = sbr.rel (%p189) target = $region36
        $region35: #{deconv_block_forward.1} parent=31 // pred_region
          %s192 = smul.u32 10, %s12
          %p193 = scmp.lt.s32.totalorder %s192, 19
          %s194 = scalar_select %p193, %s192, 19
          %s195 = smul.addr %s194, 8
          %s196 = scalar_lea.vmem %s0, %s195
          %s197 = smul.u32 10, %s12
        $region36: #{deconv_block_forward.1} parent=31 // pred_fallthru
          _
      $region32: #{deconv_block_forward.1} parent=5 // pred_fallthru
        _
      %p198 = scmp.le.s32.totalorder 1, %s12
      %p199 = scmp.lt.s32.totalorder %s12, 3
      %p200 = pnand %p198, %p199
      %p201 = pneg %p200
      // Predicated region
      $region37: #{deconv_block_forward.1} parent=5 // pred_check
        _
      $region38: #{deconv_block_forward.1} parent=5 // pred_check_branch
        %203 = sbr.rel (%p200) target = $region40
      $region39: #{deconv_block_forward.1} parent=5 // pred_region
        %s204 = ssub.s32 %s12, 1
        // Predicated region
        $region41: #{deconv_block_forward.1} parent=39 // pred_check
          %p205 = pneg %p80
        $region42: #{deconv_block_forward.1} parent=39 // pred_check_branch
          %207 = sbr.rel (%p205) target = $region44
        $region43: #{deconv_block_forward.1} parent=39 // pred_region
          %208 = dma.done [#allocation3], 24576
        $region44: #{deconv_block_forward.1} parent=39 // pred_fallthru
          _
        %s209 = smul.u32 10, %s17
        %p210 = scmp.lt.s32.totalorder %s209, 19
        %s211 = scalar_select %p210, %s209, 19
        %s212 = smul.addr %s211, 8
        %s213 = scalar_lea.vmem %s0, %s212
        %p214 = pneg %p38
        %p215 = pneg %p35
        %p216 = pneg %p59
        %p217 = pneg %p56
        %p218 = pneg %p80
        %p219 = pneg %p77
        %p220 = pneg %p101
        %p221 = pneg %p98
        %p222 = pneg %p122
        %p223 = pneg %p119
        %p224 = pneg %p148
        %p225 = pneg %p145
        %s226 = smul.u32 10, %s17
        %p227 = scmp.lt.s32.totalorder %s226, 19
        %s228 = scalar_select %p227, %s226, 19
        %s229 = smul.addr %s228, 2
        %s230 = smul.addr %s229, 8
        %s231 = scalar_lea.vmem %s5, %s230
        %s232 = smul.u32 10, %s17
        %p233 = scmp.lt.s32.totalorder %s232, 19
        %s234 = scalar_select %p233, %s232, 19
        %s235 = smul.addr %s234, 8
        %s236 = scalar_lea.vmem %s0, %s235
        %s237 = smul.u32 10, %s17
        %s238 = smul.u32 10, %s17
        %p239 = scmp.lt.s32.totalorder %s238, 19
        %s240 = scalar_select %p239, %s238, 19
        %s241 = smul.addr %s240, 2
        %s242 = smul.addr %s241, 8
        %s243 = scalar_lea.vmem %s5, %s242
        %s244 = smul.u32 10, %s17
        %v245 = vld [vmem:[%s4] sm:$0xff]
        %v246 = vld [vmem:[%s4 + $0x8] sm:$0xff]
        %v247 = vld [vmem:[%s4 + $0x10] sm:$0xff]
        %v248 = vld [vmem:[%s4 + $0x18] sm:$0xff]
        %v249 = vld [vmem:[%s4 + $0x20] sm:$0xff]
        %v250 = vld [vmem:[%s4 + $0x28] sm:$0xff]
        %v251 = vld [vmem:[%s4 + $0x30] sm:$0xff]
        %v252 = vld [vmem:[%s4 + $0x38] sm:$0xff]
        %v253 = vld [vmem:[%s4 + $0x40] sm:$0xff]
        %v254 = vld [vmem:[%s4 + $0x48] sm:$0xff]
        %v255 = vld [vmem:[%s236] sm:$0xff]
        %v256 = vld [vmem:[%s236 + $0x8] sm:$0xff]
        %v257 = vld [vmem:[%s236 + $0x10] sm:$0xff]
        %v258 = vld [vmem:[%s236 + $0x18] sm:$0xff]
        %v259 = vld [vmem:[%s236 + $0x20] sm:$0xff]
        %v260 = vld [vmem:[%s236 + $0x28] sm:$0xff]
        %v261 = vld [vmem:[%s236 + $0x30] sm:$0xff]
        %v262 = vld [vmem:[%s236 + $0x38] sm:$0xff]
        %v263 = vld [vmem:[%s236 + $0x40] sm:$0xff]
        %v264 = vld [vmem:[%s236 + $0x48] sm:$0xff]
        %v265 = vld [vmem:[%s1] sm:$0xff]
        %v266 = vld [vmem:[%s1 + $0x8] sm:$0xff]
        %v267 = vld [vmem:[%s1 + $0x10] sm:$0xff]
        %v268 = vld [vmem:[%s1 + $0x18] sm:$0xff]
        %v269 = vld [vmem:[%s1 + $0x20] sm:$0xff]
        %v270 = vld [vmem:[%s1 + $0x28] sm:$0xff]
        %v271 = vld [vmem:[%s1 + $0x30] sm:$0xff]
        %v272 = vld [vmem:[%s1 + $0x38] sm:$0xff]
        %v273 = vld [vmem:[%s1 + $0x40] sm:$0xff]
        %v274 = vld [vmem:[%s1 + $0x48] sm:$0xff]
        %v275 = vld [vmem:[%s1 + $0x50] sm:$0xff]
        %v276 = vld [vmem:[%s1 + $0x58] sm:$0xff]
        %v277 = vld [vmem:[%s1 + $0x60] sm:$0xff]
        %v278 = vld [vmem:[%s1 + $0x68] sm:$0xff]
        %v279 = vld [vmem:[%s1 + $0x70] sm:$0xff]
        %v280 = vld [vmem:[%s1 + $0x78] sm:$0xff]
        %s281 = scalar_lea.vmem %s1, 128
        %v282 = vld [vmem:[%s281] sm:$0xff]
        %v283 = vld [vmem:[%s281 + $0x8] sm:$0xff]
        %v284 = vld [vmem:[%s281 + $0x10] sm:$0xff]
        %v285 = vld [vmem:[%s281 + $0x18] sm:$0xff]
        %v286 = vld [vmem:[%s281 + $0x20] sm:$0xff]
        %v287 = vld [vmem:[%s281 + $0x28] sm:$0xff]
        %v288 = vld [vmem:[%s281 + $0x30] sm:$0xff]
        %v289 = vld [vmem:[%s281 + $0x38] sm:$0xff]
        %v290 = vld [vmem:[%s281 + $0x40] sm:$0xff]
        %v291 = vld [vmem:[%s281 + $0x48] sm:$0xff]
        %v292 = vld [vmem:[%s281 + $0x50] sm:$0xff]
        %v293 = vld [vmem:[%s281 + $0x58] sm:$0xff]
        %v294 = vld [vmem:[%s281 + $0x60] sm:$0xff]
        %v295 = vld [vmem:[%s281 + $0x68] sm:$0xff]
        %v296 = vld [vmem:[%s281 + $0x70] sm:$0xff]
        %v297 = vld [vmem:[%s281 + $0x78] sm:$0xff]
        %s298 = scalar_lea.vmem %s1, 256
        %v299 = vld [vmem:[%s298] sm:$0xff]
        %v300 = vld [vmem:[%s298 + $0x8] sm:$0xff]
        %v301 = vld [vmem:[%s298 + $0x10] sm:$0xff]
        %v302 = vld [vmem:[%s298 + $0x18] sm:$0xff]
        %v303 = vld [vmem:[%s298 + $0x20] sm:$0xff]
        %v304 = vld [vmem:[%s298 + $0x28] sm:$0xff]
        %v305 = vld [vmem:[%s298 + $0x30] sm:$0xff]
        %v306 = vld [vmem:[%s298 + $0x38] sm:$0xff]
        %v307 = vld [vmem:[%s298 + $0x40] sm:$0xff]
        %v308 = vld [vmem:[%s298 + $0x48] sm:$0xff]
        %v309 = vld [vmem:[%s298 + $0x50] sm:$0xff]
        %v310 = vld [vmem:[%s298 + $0x58] sm:$0xff]
        %v311 = vld [vmem:[%s298 + $0x60] sm:$0xff]
        %v312 = vld [vmem:[%s298 + $0x68] sm:$0xff]
        %v313 = vld [vmem:[%s298 + $0x70] sm:$0xff]
        %v314 = vld [vmem:[%s298 + $0x78] sm:$0xff]
        %v315 = vld [vmem:[%s3] ss:$2 sm:$0x3]
        %v316 = vrot.slane %v255, 7
        %v317 = vrot.slane %v256, 7
        %v318 = vrot.slane %v257, 7
        %v319 = vrot.slane %v258, 7
        %v320 = vrot.slane %v259, 7
        %v321 = vrot.slane %v260, 7
        %v322 = vrot.slane %v261, 7
        %v323 = vrot.slane %v262, 7
        %v324 = vrot.slane %v263, 7
        %v325 = vrot.slane %v264, 7
        %v326 = vlaneseq
        %v327 = vshrl.u32 %v326, 7
        %vm328 = vcmp.lt.s32.totalorder %v327, 1
        %v329 = vsel %vm328, %v324, %v325
        %v330 = vsel %vm328, %v323, %v324
        %v331 = vsel %vm328, %v322, %v323
        %v332 = vsel %vm328, %v321, %v322
        %v333 = vsel %vm328, %v320, %v321
        %v334 = vsel %vm328, %v319, %v320
        %v335 = vsel %vm328, %v318, %v319
        %v336 = vsel %vm328, %v317, %v318
        %v337 = vsel %vm328, %v316, %v317
        %v338 = vsel %vm328, %v325, %v316
        %vm339 = vcmask 523264
        %v341 = vsel %vm339, %v255, 0
        %v344 = vsel %vm339, %v256, 0
        %v347 = vsel %vm339, %v257, 0
        %v350 = vsel %vm339, %v258, 0
        %v353 = vsel %vm339, %v259, 0
        %v356 = vsel %vm339, %v260, 0
        %v359 = vsel %vm339, %v261, 0
        %v362 = vsel %vm339, %v262, 0
        %v365 = vsel %vm339, %v263, 0
        %v368 = vsel %vm339, %v264, 0
        %370 = vmatprep.subr.mxu0 %v283
        %371 = vmatpush1.msra.mxu0 %v282
        %372 = vmatprep.subr.mxu0 %v285
        %373 = vmatpush1.msra.mxu0 %v284
        %374 = vmatprep.subr.mxu0 %v287
        %375 = vmatpush1.msra.mxu0 %v286
        %376 = vmatprep.subr.mxu0 %v289
        %377 = vmatpush1.msra.mxu0 %v288
        %378 = vmatprep.subr.mxu0 %v291
        %379 = vmatpush1.msra.mxu0 %v290
        %380 = vmatprep.subr.mxu0 %v293
        %381 = vmatpush1.msra.mxu0 %v292
        %382 = vmatprep.subr.mxu0 %v295
        %383 = vmatpush1.msra.mxu0 %v294
        %384 = vmatprep.subr.mxu0 %v297
        %385 = vmatpush1.msra.mxu0 %v296
        %386 = vmatprep.subr.mxu0 0.0
        %387 = vmatpush1.msra.mxu0 0.0
        %388 = vmatprep.subr.mxu0 0.0
        %389 = vmatpush1.msra.mxu0 0.0
        %390 = vmatprep.subr.mxu0 0.0
        %391 = vmatpush1.msra.mxu0 0.0
        %392 = vmatprep.subr.mxu0 0.0
        %393 = vmatpush1.msra.mxu0 0.0
        %394 = vmatprep.subr.mxu0 0.0
        %395 = vmatpush1.msra.mxu0 0.0
        %396 = vmatprep.subr.mxu0 0.0
        %397 = vmatpush1.msra.mxu0 0.0
        %398 = vmatprep.subr.mxu0 0.0
        %399 = vmatpush1.msra.mxu0 0.0
        %400 = vmatprep.subr.mxu0 0.0
        %401 = vmatpush1.msra.mxu0 0.0
        %402 = vmatprep.subr.mxu0 0.0
        %403 = vmatpush1.msra.mxu0 0.0
        %404 = vmatprep.subr.mxu0 0.0
        %405 = vmatpush1.msra.mxu0 0.0
        %406 = vmatprep.subr.mxu0 0.0
        %407 = vmatpush1.msra.mxu0 0.0
        %408 = vmatprep.subr.mxu0 0.0
        %409 = vmatpush1.msra.mxu0 0.0
        %410 = vmatprep.subr.mxu0 0.0
        %411 = vmatpush1.msra.mxu0 0.0
        %412 = vmatprep.subr.mxu0 0.0
        %413 = vmatpush1.msra.mxu0 0.0
        %414 = vmatprep.subr.mxu0 0.0
        %415 = vmatpush1.msra.mxu0 0.0
        %416 = vmatprep.subr.mxu0 0.0
        %417 = vmatpush1.msra.mxu0 0.0
        %418 = vmatprep.subr.mxu0 0.0
        %419 = vmatpush1.msra.mxu0 0.0
        %420 = vmatprep.subr.mxu0 0.0
        %421 = vmatpush1.msra.mxu0 0.0
        %422 = vmatprep.subr.mxu0 0.0
        %423 = vmatpush1.msra.mxu0 0.0
        %424 = vmatprep.subr.mxu0 0.0
        %425 = vmatpush1.msra.mxu0 0.0
        %426 = vmatprep.subr.mxu0 0.0
        %427 = vmatpush1.msra.mxu0 0.0
        %428 = vmatprep.subr.mxu0 0.0
        %429 = vmatpush1.msra.mxu0 0.0
        %430 = vmatprep.subr.mxu0 0.0
        %431 = vmatpush1.msra.mxu0 0.0
        %432 = vmatprep.subr.mxu0 0.0
        %433 = vmatpush1.msra.mxu0 0.0
        %434 = vmatprep.mubr.f32.mxu0 0.0
        %435 = vmatmul.mubr.f32.gmra.mrb[0].mxu0 %v341
        %v436 = vpop.f32.mrb[0].mxu0
        %v437 = vadd.f32 0.0, %v436
        %v438 = vpop.f32.mrb[0].mxu0
        %v439 = vadd.f32 0.0, %v438
        %440 = vmatprep.mubr.f32.mxu0 0.0
        %441 = vmatmul.mubr.f32.gmra.mrb[0].mxu0 %v344
        %v442 = vpop.f32.mrb[0].mxu0
        %v443 = vadd.f32 0.0, %v442
        %v444 = vpop.f32.mrb[0].mxu0
        %v445 = vadd.f32 0.0, %v444
        %446 = vmatprep.mubr.f32.mxu0 0.0
        %447 = vmatmul.mubr.f32.gmra.mrb[0].mxu0 %v347
        %v448 = vpop.f32.mrb[0].mxu0
        %v449 = vadd.f32 0.0, %v448
        %v450 = vpop.f32.mrb[0].mxu0
        %v451 = vadd.f32 0.0, %v450
        %452 = vmatprep.mubr.f32.mxu0 0.0
        %453 = vmatmul.mubr.f32.gmra.mrb[0].mxu0 %v350
        %v454 = vpop.f32.mrb[0].mxu0
        %v455 = vadd.f32 0.0, %v454
        %v456 = vpop.f32.mrb[0].mxu0
        %v457 = vadd.f32 0.0, %v456
        %458 = vmatprep.mubr.f32.mxu0 0.0
        %459 = vmatmul.mubr.f32.gmra.mrb[0].mxu0 %v353
        %v460 = vpop.f32.mrb[0].mxu0
        %v461 = vadd.f32 0.0, %v460
        %v462 = vpop.f32.mrb[0].mxu0
        %v463 = vadd.f32 0.0, %v462
        %464 = vmatprep.mubr.f32.mxu0 0.0
        %465 = vmatmul.mubr.f32.gmra.mrb[0].mxu0 %v356
        %v466 = vpop.f32.mrb[0].mxu0
        %v467 = vadd.f32 0.0, %v466
        %v468 = vpop.f32.mrb[0].mxu0
        %v469 = vadd.f32 0.0, %v468
        %470 = vmatprep.mubr.f32.mxu0 0.0
        %471 = vmatmul.mubr.f32.gmra.mrb[0].mxu0 %v359
        %v472 = vpop.f32.mrb[0].mxu0
        %v473 = vadd.f32 0.0, %v472
        %v474 = vpop.f32.mrb[0].mxu0
        %v475 = vadd.f32 0.0, %v474
        %476 = vmatprep.mubr.f32.mxu0 0.0
        %477 = vmatmul.mubr.f32.gmra.mrb[0].mxu0 %v362
        %v478 = vpop.f32.mrb[0].mxu0
        %v479 = vadd.f32 0.0, %v478
        %v480 = vpop.f32.mrb[0].mxu0
        %v481 = vadd.f32 0.0, %v480
        %482 = vmatprep.mubr.f32.mxu0 0.0
        %483 = vmatmul.mubr.f32.gmra.mrb[0].mxu0 %v365
        %v484 = vpop.f32.mrb[0].mxu0
        %v485 = vadd.f32 0.0, %v484
        %v486 = vpop.f32.mrb[0].mxu0
        %v487 = vadd.f32 0.0, %v486
        %488 = vmatprep.mubr.f32.mxu0 0.0
        %489 = vmatmul.mubr.f32.gmra.mrb[0].mxu0 %v368
        %v490 = vpop.f32.mrb[0].mxu0
        %v491 = vadd.f32 0.0, %v490
        %v492 = vpop.f32.mrb[0].mxu0
        %v493 = vadd.f32 0.0, %v492
        %494 = vdwg.mxu0
        %v496 = vsel %vm339, %v338, 0
        %v499 = vsel %vm339, %v337, 0
        %v502 = vsel %vm339, %v336, 0
        %v505 = vsel %vm339, %v335, 0
        %v508 = vsel %vm339, %v334, 0
        %v511 = vsel %vm339, %v333, 0
        %v514 = vsel %vm339, %v332, 0
        %v517 = vsel %vm339, %v331, 0
        %v520 = vsel %vm339, %v330, 0
        %v523 = vsel %vm339, %v329, 0
        %525 = vmatprep.subr.mxu0 %v266
        %526 = vmatpush1.msra.mxu0 %v265
        %527 = vmatprep.subr.mxu0 %v268
        %528 = vmatpush1.msra.mxu0 %v267
        %529 = vmatprep.subr.mxu0 %v270
        %530 = vmatpush1.msra.mxu0 %v269
        %531 = vmatprep.subr.mxu0 %v272
        %532 = vmatpush1.msra.mxu0 %v271
        %533 = vmatprep.subr.mxu0 %v274
        %534 = vmatpush1.msra.mxu0 %v273
        %535 = vmatprep.subr.mxu0 %v276
        %536 = vmatpush1.msra.mxu0 %v275
        %537 = vmatprep.subr.mxu0 %v278
        %538 = vmatpush1.msra.mxu0 %v277
        %539 = vmatprep.subr.mxu0 %v280
        %540 = vmatpush1.msra.mxu0 %v279
        %541 = vmatprep.subr.mxu0 0.0
        %542 = vmatpush1.msra.mxu0 0.0
        %543 = vmatprep.subr.mxu0 0.0
        %544 = vmatpush1.msra.mxu0 0.0
        %545 = vmatprep.subr.mxu0 0.0
        %546 = vmatpush1.msra.mxu0 0.0
        %547 = vmatprep.subr.mxu0 0.0
        %548 = vmatpush1.msra.mxu0 0.0
        %549 = vmatprep.subr.mxu0 0.0
        %550 = vmatpush1.msra.mxu0 0.0
        %551 = vmatprep.subr.mxu0 0.0
        %552 = vmatpush1.msra.mxu0 0.0
        %553 = vmatprep.subr.mxu0 0.0
        %554 = vmatpush1.msra.mxu0 0.0
        %555 = vmatprep.subr.mxu0 0.0
        %556 = vmatpush1.msra.mxu0 0.0
        %557 = vmatprep.subr.mxu0 0.0
        %558 = vmatpush1.msra.mxu0 0.0
        %559 = vmatprep.subr.mxu0 0.0
        %560 = vmatpush1.msra.mxu0 0.0
        %561 = vmatprep.subr.mxu0 0.0
        %562 = vmatpush1.msra.mxu0 0.0
        %563 = vmatprep.subr.mxu0 0.0
        %564 = vmatpush1.msra.mxu0 0.0
        %565 = vmatprep.subr.mxu0 0.0
        %566 = vmatpush1.msra.mxu0 0.0
        %567 = vmatprep.subr.mxu0 0.0
        %568 = vmatpush1.msra.mxu0 0.0
        %569 = vmatprep.subr.mxu0 0.0
        %570 = vmatpush1.msra.mxu0 0.0
        %571 = vmatprep.subr.mxu0 0.0
        %572 = vmatpush1.msra.mxu0 0.0
        %573 = vmatprep.subr.mxu0 0.0
        %574 = vmatpush1.msra.mxu0 0.0
        %575 = vmatprep.subr.mxu0 0.0
        %576 = vmatpush1.msra.mxu0 0.0
        %577 = vmatprep.subr.mxu0 0.0
        %578 = vmatpush1.msra.mxu0 0.0
        %579 = vmatprep.subr.mxu0 0.0
        %580 = vmatpush1.msra.mxu0 0.0
        %581 = vmatprep.subr.mxu0 0.0
        %582 = vmatpush1.msra.mxu0 0.0
        %583 = vmatprep.subr.mxu0 0.0
        %584 = vmatpush1.msra.mxu0 0.0
        %585 = vmatprep.subr.mxu0 0.0
        %586 = vmatpush1.msra.mxu0 0.0
        %587 = vmatprep.subr.mxu0 0.0
        %588 = vmatpush1.msra.mxu0 0.0
        %589 = vmatprep.mubr.f32.mxu0 0.0
        %590 = vmatmul.mubr.f32.gmra.mrb[0].mxu0 %v496
        %v591 = vpop.f32.mrb[0].mxu0
        %v592 = vadd.f32 %v437, %v591
        %v593 = vpop.f32.mrb[0].mxu0
        %v594 = vadd.f32 %v439, %v593
        %595 = vmatprep.mubr.f32.mxu0 0.0
        %596 = vmatmul.mubr.f32.gmra.mrb[0].mxu0 %v499
        %v597 = vpop.f32.mrb[0].mxu0
        %v598 = vadd.f32 %v443, %v597
        %v599 = vpop.f32.mrb[0].mxu0
        %v600 = vadd.f32 %v445, %v599
        %601 = vmatprep.mubr.f32.mxu0 0.0
        %602 = vmatmul.mubr.f32.gmra.mrb[0].mxu0 %v502
        %v603 = vpop.f32.mrb[0].mxu0
        %v604 = vadd.f32 %v449, %v603
        %v605 = vpop.f32.mrb[0].mxu0
        %v606 = vadd.f32 %v451, %v605
        %607 = vmatprep.mubr.f32.mxu0 0.0
        %608 = vmatmul.mubr.f32.gmra.mrb[0].mxu0 %v505
        %v609 = vpop.f32.mrb[0].mxu0
        %v610 = vadd.f32 %v455, %v609
        %v611 = vpop.f32.mrb[0].mxu0
        %v612 = vadd.f32 %v457, %v611
        %613 = vmatprep.mubr.f32.mxu0 0.0
        %614 = vmatmul.mubr.f32.gmra.mrb[0].mxu0 %v508
        %v615 = vpop.f32.mrb[0].mxu0
        %v616 = vadd.f32 %v461, %v615
        %v617 = vpop.f32.mrb[0].mxu0
        %v618 = vadd.f32 %v463, %v617
        %619 = vmatprep.mubr.f32.mxu0 0.0
        %620 = vmatmul.mubr.f32.gmra.mrb[0].mxu0 %v511
        %v621 = vpop.f32.mrb[0].mxu0
        %v622 = vadd.f32 %v467, %v621
        %v623 = vpop.f32.mrb[0].mxu0
        %v624 = vadd.f32 %v469, %v623
        %625 = vmatprep.mubr.f32.mxu0 0.0
        %626 = vmatmul.mubr.f32.gmra.mrb[0].mxu0 %v514
        %v627 = vpop.f32.mrb[0].mxu0
        %v628 = vadd.f32 %v473, %v627
        %v629 = vpop.f32.mrb[0].mxu0
        %v630 = vadd.f32 %v475, %v629
        %631 = vmatprep.mubr.f32.mxu0 0.0
        %632 = vmatmul.mubr.f32.gmra.mrb[0].mxu0 %v517
        %v633 = vpop.f32.mrb[0].mxu0
        %v634 = vadd.f32 %v479, %v633
        %v635 = vpop.f32.mrb[0].mxu0
        %v636 = vadd.f32 %v481, %v635
        %637 = vmatprep.mubr.f32.mxu0 0.0
        %638 = vmatmul.mubr.f32.gmra.mrb[0].mxu0 %v520
        %v639 = vpop.f32.mrb[0].mxu0
        %v640 = vadd.f32 %v485, %v639
        %v641 = vpop.f32.mrb[0].mxu0
        %v642 = vadd.f32 %v487, %v641
        %643 = vmatprep.mubr.f32.mxu0 0.0
        %644 = vmatmul.mubr.f32.gmra.mrb[0].mxu0 %v523
        %v645 = vpop.f32.mrb[0].mxu0
        %v646 = vadd.f32 %v491, %v645
        %v647 = vpop.f32.mrb[0].mxu0
        %v648 = vadd.f32 %v493, %v647
        %649 = vdwg.mxu0
        %v650 = vrot.slane %v255, 1
        %v651 = vrot.slane %v256, 1
        %v652 = vrot.slane %v257, 1
        %v653 = vrot.slane %v258, 1
        %v654 = vrot.slane %v259, 1
        %v655 = vrot.slane %v260, 1
        %v656 = vrot.slane %v261, 1
        %v657 = vrot.slane %v262, 1
        %v658 = vrot.slane %v263, 1
        %v659 = vrot.slane %v264, 1
        %vm660 = vcmp.lt.s32.totalorder %v327, 7
        %v661 = vsel %vm660, %v658, %v659
        %v662 = vsel %vm660, %v657, %v658
        %v663 = vsel %vm660, %v656, %v657
        %v664 = vsel %vm660, %v655, %v656
        %v665 = vsel %vm660, %v654, %v655
        %v666 = vsel %vm660, %v653, %v654
        %v667 = vsel %vm660, %v652, %v653
        %v668 = vsel %vm660, %v651, %v652
        %v669 = vsel %vm660, %v650, %v651
        %v670 = vsel %vm660, %v659, %v650
        %v672 = vsel %vm339, %v669, 0
        %v675 = vsel %vm339, %v668, 0
        %v678 = vsel %vm339, %v667, 0
        %v681 = vsel %vm339, %v666, 0
        %v684 = vsel %vm339, %v665, 0
        %v687 = vsel %vm339, %v664, 0
        %v690 = vsel %vm339, %v663, 0
        %v693 = vsel %vm339, %v662, 0
        %v696 = vsel %vm339, %v661, 0
        %v699 = vsel %vm339, %v670, 0
        %701 = vmatprep.subr.mxu0 %v300
        %702 = vmatpush1.msra.mxu0 %v299
        %703 = vmatprep.subr.mxu0 %v302
        %704 = vmatpush1.msra.mxu0 %v301
        %705 = vmatprep.subr.mxu0 %v304
        %706 = vmatpush1.msra.mxu0 %v303
        %707 = vmatprep.subr.mxu0 %v306
        %708 = vmatpush1.msra.mxu0 %v305
        %709 = vmatprep.subr.mxu0 %v308
        %710 = vmatpush1.msra.mxu0 %v307
        %711 = vmatprep.subr.mxu0 %v310
        %712 = vmatpush1.msra.mxu0 %v309
        %713 = vmatprep.subr.mxu0 %v312
        %714 = vmatpush1.msra.mxu0 %v311
        %715 = vmatprep.subr.mxu0 %v314
        %716 = vmatpush1.msra.mxu0 %v313
        %717 = vmatprep.subr.mxu0 0.0
        %718 = vmatpush1.msra.mxu0 0.0
        %719 = vmatprep.subr.mxu0 0.0
        %720 = vmatpush1.msra.mxu0 0.0
        %721 = vmatprep.subr.mxu0 0.0
        %722 = vmatpush1.msra.mxu0 0.0
        %723 = vmatprep.subr.mxu0 0.0
        %724 = vmatpush1.msra.mxu0 0.0
        %725 = vmatprep.subr.mxu0 0.0
        %726 = vmatpush1.msra.mxu0 0.0
        %727 = vmatprep.subr.mxu0 0.0
        %728 = vmatpush1.msra.mxu0 0.0
        %729 = vmatprep.subr.mxu0 0.0
        %730 = vmatpush1.msra.mxu0 0.0
        %731 = vmatprep.subr.mxu0 0.0
        %732 = vmatpush1.msra.mxu0 0.0
        %733 = vmatprep.subr.mxu0 0.0
        %734 = vmatpush1.msra.mxu0 0.0
        %735 = vmatprep.subr.mxu0 0.0
        %736 = vmatpush1.msra.mxu0 0.0
        %737 = vmatprep.subr.mxu0 0.0
        %738 = vmatpush1.msra.mxu0 0.0
        %739 = vmatprep.subr.mxu0 0.0
        %740 = vmatpush1.msra.mxu0 0.0
        %741 = vmatprep.subr.mxu0 0.0
        %742 = vmatpush1.msra.mxu0 0.0
        %743 = vmatprep.subr.mxu0 0.0
        %744 = vmatpush1.msra.mxu0 0.0
        %745 = vmatprep.subr.mxu0 0.0
        %746 = vmatpush1.msra.mxu0 0.0
        %747 = vmatprep.subr.mxu0 0.0
        %748 = vmatpush1.msra.mxu0 0.0
        %749 = vmatprep.subr.mxu0 0.0
        %750 = vmatpush1.msra.mxu0 0.0
        %751 = vmatprep.subr.mxu0 0.0
        %752 = vmatpush1.msra.mxu0 0.0
        %753 = vmatprep.subr.mxu0 0.0
        %754 = vmatpush1.msra.mxu0 0.0
        %755 = vmatprep.subr.mxu0 0.0
        %756 = vmatpush1.msra.mxu0 0.0
        %757 = vmatprep.subr.mxu0 0.0
        %758 = vmatpush1.msra.mxu0 0.0
        %759 = vmatprep.subr.mxu0 0.0
        %760 = vmatpush1.msra.mxu0 0.0
        %761 = vmatprep.subr.mxu0 0.0
        %762 = vmatpush1.msra.mxu0 0.0
        %763 = vmatprep.subr.mxu0 0.0
        %764 = vmatpush1.msra.mxu0 0.0
        %765 = vmatprep.mubr.f32.mxu0 0.0
        %766 = vmatmul.mubr.f32.gmra.mrb[0].mxu0 %v672
        %v767 = vpop.f32.mrb[0].mxu0
        %v768 = vadd.f32 0.0, %v767
        %v769 = vpop.f32.mrb[0].mxu0
        %v770 = vadd.f32 0.0, %v769
        %771 = vmatprep.mubr.f32.mxu0 0.0
        %772 = vmatmul.mubr.f32.gmra.mrb[0].mxu0 %v675
        %v773 = vpop.f32.mrb[0].mxu0
        %v774 = vadd.f32 0.0, %v773
        %v775 = vpop.f32.mrb[0].mxu0
        %v776 = vadd.f32 0.0, %v775
        %777 = vmatprep.mubr.f32.mxu0 0.0
        %778 = vmatmul.mubr.f32.gmra.mrb[0].mxu0 %v678
        %v779 = vpop.f32.mrb[0].mxu0
        %v780 = vadd.f32 0.0, %v779
        %v781 = vpop.f32.mrb[0].mxu0
        %v782 = vadd.f32 0.0, %v781
        %783 = vmatprep.mubr.f32.mxu0 0.0
        %784 = vmatmul.mubr.f32.gmra.mrb[0].mxu0 %v681
        %v785 = vpop.f32.mrb[0].mxu0
        %v786 = vadd.f32 0.0, %v785
        %v787 = vpop.f32.mrb[0].mxu0
        %v788 = vadd.f32 0.0, %v787
        %789 = vmatprep.mubr.f32.mxu0 0.0
        %790 = vmatmul.mubr.f32.gmra.mrb[0].mxu0 %v684
        %v791 = vpop.f32.mrb[0].mxu0
        %v792 = vadd.f32 0.0, %v791
        %v793 = vpop.f32.mrb[0].mxu0
        %v794 = vadd.f32 0.0, %v793
        %795 = vmatprep.mubr.f32.mxu0 0.0
        %796 = vmatmul.mubr.f32.gmra.mrb[0].mxu0 %v687
        %v797 = vpop.f32.mrb[0].mxu0
        %v798 = vadd.f32 0.0, %v797
        %v799 = vpop.f32.mrb[0].mxu0
        %v800 = vadd.f32 0.0, %v799
        %801 = vmatprep.mubr.f32.mxu0 0.0
        %802 = vmatmul.mubr.f32.gmra.mrb[0].mxu0 %v690
        %v803 = vpop.f32.mrb[0].mxu0
        %v804 = vadd.f32 0.0, %v803
        %v805 = vpop.f32.mrb[0].mxu0
        %v806 = vadd.f32 0.0, %v805
        %807 = vmatprep.mubr.f32.mxu0 0.0
        %808 = vmatmul.mubr.f32.gmra.mrb[0].mxu0 %v693
        %v809 = vpop.f32.mrb[0].mxu0
        %v810 = vadd.f32 0.0, %v809
        %v811 = vpop.f32.mrb[0].mxu0
        %v812 = vadd.f32 0.0, %v811
        %813 = vmatprep.mubr.f32.mxu0 0.0
        %814 = vmatmul.mubr.f32.gmra.mrb[0].mxu0 %v696
        %v815 = vpop.f32.mrb[0].mxu0
        %v816 = vadd.f32 0.0, %v815
        %v817 = vpop.f32.mrb[0].mxu0
        %v818 = vadd.f32 0.0, %v817
        %819 = vmatprep.mubr.f32.mxu0 0.0
        %820 = vmatmul.mubr.f32.gmra.mrb[0].mxu0 %v699
        %v821 = vpop.f32.mrb[0].mxu0
        %v822 = vadd.f32 0.0, %v821
        %v823 = vpop.f32.mrb[0].mxu0
        %v824 = vadd.f32 0.0, %v823
        %825 = vdwg.mxu0
        %v826 = vadd.f32 %v592, %v768
        %v827 = vadd.f32 %v594, %v770
        %v828 = vadd.f32 %v598, %v774
        %v829 = vadd.f32 %v600, %v776
        %v830 = vadd.f32 %v604, %v780
        %v831 = vadd.f32 %v606, %v782
        %v832 = vadd.f32 %v610, %v786
        %v833 = vadd.f32 %v612, %v788
        %v834 = vadd.f32 %v616, %v792
        %v835 = vadd.f32 %v618, %v794
        %v836 = vadd.f32 %v622, %v798
        %v837 = vadd.f32 %v624, %v800
        %v838 = vadd.f32 %v628, %v804
        %v839 = vadd.f32 %v630, %v806
        %v840 = vadd.f32 %v634, %v810
        %v841 = vadd.f32 %v636, %v812
        %v842 = vadd.f32 %v640, %v816
        %v843 = vadd.f32 %v642, %v818
        %v844 = vadd.f32 %v646, %v822
        %v845 = vadd.f32 %v648, %v824
        %v847 = vlaneseq
        %v848 = vshrl.u32 %v847, 7
        %v849 = vsub.s32 0, %v848
        %v850 = vrot.slane %v315, %v849
        %v851 = vlaneseq
        %v852 = vshrl.u32 %v851, 7
        %v853 = vsub.s32 1, %v852
        %v854 = vrot.slane %v315, %v853
        %v857 = vadd.f32 %v826, %v850
        %v858 = vadd.f32 %v827, %v854
        %v859 = vadd.f32 %v828, %v850
        %v860 = vadd.f32 %v829, %v854
        %v861 = vadd.f32 %v830, %v850
        %v862 = vadd.f32 %v831, %v854
        %v863 = vadd.f32 %v832, %v850
        %v864 = vadd.f32 %v833, %v854
        %v865 = vadd.f32 %v834, %v850
        %v866 = vadd.f32 %v835, %v854
        %v867 = vadd.f32 %v836, %v850
        %v868 = vadd.f32 %v837, %v854
        %v869 = vadd.f32 %v838, %v850
        %v870 = vadd.f32 %v839, %v854
        %v871 = vadd.f32 %v840, %v850
        %v872 = vadd.f32 %v841, %v854
        %v873 = vadd.f32 %v842, %v850
        %v874 = vadd.f32 %v843, %v854
        %v875 = vadd.f32 %v844, %v850
        %v876 = vadd.f32 %v845, %v854
        %v877 = vmax.f32 %v857, 0.0
        %v878 = vmax.f32 %v858, 0.0
        %v879 = vmax.f32 %v859, 0.0
        %v880 = vmax.f32 %v860, 0.0
        %v881 = vmax.f32 %v861, 0.0
        %v882 = vmax.f32 %v862, 0.0
        %v883 = vmax.f32 %v863, 0.0
        %v884 = vmax.f32 %v864, 0.0
        %v885 = vmax.f32 %v865, 0.0
        %v886 = vmax.f32 %v866, 0.0
        %v887 = vmax.f32 %v867, 0.0
        %v888 = vmax.f32 %v868, 0.0
        %v889 = vmax.f32 %v869, 0.0
        %v890 = vmax.f32 %v870, 0.0
        %v891 = vmax.f32 %v871, 0.0
        %v892 = vmax.f32 %v872, 0.0
        %v893 = vmax.f32 %v873, 0.0
        %v894 = vmax.f32 %v874, 0.0
        %v895 = vmax.f32 %v875, 0.0
        %v896 = vmax.f32 %v876, 0.0
        %898 = vset.pattern.permute.xlu0 0
        %899 = vperm.xlu0 %898, %v245
        %v900 = vpop.permute.xlu0 %899
        %903 = vset.pattern.permute.xlu0 0
        %904 = vperm.xlu0 %903, %v246
        %v905 = vpop.permute.xlu0 %904
        %908 = vset.pattern.permute.xlu0 0
        %909 = vperm.xlu0 %908, %v247
        %v910 = vpop.permute.xlu0 %909
        %913 = vset.pattern.permute.xlu0 0
        %914 = vperm.xlu0 %913, %v248
        %v915 = vpop.permute.xlu0 %914
        %918 = vset.pattern.permute.xlu0 0
        %919 = vperm.xlu0 %918, %v249
        %v920 = vpop.permute.xlu0 %919
        %923 = vset.pattern.permute.xlu0 0
        %924 = vperm.xlu0 %923, %v250
        %v925 = vpop.permute.xlu0 %924
        %928 = vset.pattern.permute.xlu0 0
        %929 = vperm.xlu0 %928, %v251
        %v930 = vpop.permute.xlu0 %929
        %933 = vset.pattern.permute.xlu0 0
        %934 = vperm.xlu0 %933, %v252
        %v935 = vpop.permute.xlu0 %934
        %938 = vset.pattern.permute.xlu0 0
        %939 = vperm.xlu0 %938, %v253
        %v940 = vpop.permute.xlu0 %939
        %943 = vset.pattern.permute.xlu0 0
        %944 = vperm.xlu0 %943, %v254
        %v945 = vpop.permute.xlu0 %944
        %v947 = vmul.f32 %v877, %v900
        %v948 = vmul.f32 %v878, %v900
        %v949 = vmul.f32 %v879, %v905
        %v950 = vmul.f32 %v880, %v905
        %v951 = vmul.f32 %v881, %v910
        %v952 = vmul.f32 %v882, %v910
        %v953 = vmul.f32 %v883, %v915
        %v954 = vmul.f32 %v884, %v915
        %v955 = vmul.f32 %v885, %v920
        %v956 = vmul.f32 %v886, %v920
        %v957 = vmul.f32 %v887, %v925
        %v958 = vmul.f32 %v888, %v925
        %v959 = vmul.f32 %v889, %v930
        %v960 = vmul.f32 %v890, %v930
        %v961 = vmul.f32 %v891, %v935
        %v962 = vmul.f32 %v892, %v935
        %v963 = vmul.f32 %v893, %v940
        %v964 = vmul.f32 %v894, %v940
        %v965 = vmul.f32 %v895, %v945
        %v966 = vmul.f32 %v896, %v945
        %v967 = vld [vmem:[#allocation2] sm:$0xff]
        %v968 = vld [vmem:[#allocation2 + $0x8] sm:$0xff]
        %v969 = vld [vmem:[#allocation2 + $0x10] sm:$0xff]
        %v970 = vld [vmem:[#allocation2 + $0x18] sm:$0xff]
        %v971 = vld [vmem:[#allocation2 + $0x20] sm:$0xff]
        %v972 = vld [vmem:[#allocation2 + $0x28] sm:$0xff]
        %v973 = vld [vmem:[#allocation2 + $0x30] sm:$0xff]
        %v974 = vld [vmem:[#allocation2 + $0x38] sm:$0xff]
        %v975 = vld [vmem:[#allocation2 + $0x40] sm:$0xff]
        %v976 = vld [vmem:[#allocation2 + $0x48] sm:$0xff]
        %v977 = vld [vmem:[#allocation2 + $0x50] sm:$0xff]
        %v978 = vld [vmem:[#allocation2 + $0x58] sm:$0xff]
        %v979 = vld [vmem:[#allocation2 + $0x60] sm:$0xff]
        %v980 = vld [vmem:[#allocation2 + $0x68] sm:$0xff]
        %v981 = vld [vmem:[#allocation2 + $0x70] sm:$0xff]
        %v982 = vld [vmem:[#allocation2 + $0x78] sm:$0xff]
        %v983 = vld [vmem:[#allocation2 + $0x80] sm:$0xff]
        %v984 = vld [vmem:[#allocation2 + $0x88] sm:$0xff]
        %v985 = vld [vmem:[#allocation2 + $0x90] sm:$0xff]
        %v986 = vld [vmem:[#allocation2 + $0x98] sm:$0xff]
        %v987 = vld [vmem:[#allocation2 + $0xa0] sm:$0xff]
        %v988 = vld [vmem:[#allocation2 + $0xa8] sm:$0xff]
        %v989 = vld [vmem:[#allocation2 + $0xb0] sm:$0xff]
        %v990 = vld [vmem:[#allocation2 + $0xb8] sm:$0xff]
        %v991 = vld [vmem:[#allocation2 + $0xc0] sm:$0xff]
        %v992 = vld [vmem:[#allocation2 + $0xc8] sm:$0xff]
        %v993 = vld [vmem:[#allocation2 + $0xd0] sm:$0xff]
        %v994 = vld [vmem:[#allocation2 + $0xd8] sm:$0xff]
        %v995 = vld [vmem:[#allocation2 + $0xe0] sm:$0xff]
        %v996 = vld [vmem:[#allocation2 + $0xe8] sm:$0xff]
        %v997 = vld [vmem:[#allocation2 + $0xf0] sm:$0xff]
        %v998 = vld [vmem:[#allocation2 + $0xf8] sm:$0xff]
        %v999 = vld [vmem:[#allocation2 + $0x100] sm:$0xff]
        %v1000 = vld [vmem:[#allocation2 + $0x108] sm:$0xff]
        %v1001 = vld [vmem:[#allocation2 + $0x110] sm:$0xff]
        %v1002 = vld [vmem:[#allocation2 + $0x118] sm:$0xff]
        %v1003 = vld [vmem:[#allocation2 + $0x120] sm:$0xff]
        %v1004 = vld [vmem:[#allocation2 + $0x128] sm:$0xff]
        %v1005 = vld [vmem:[#allocation2 + $0x130] sm:$0xff]
        %v1006 = vld [vmem:[#allocation2 + $0x138] sm:$0xff]
        %v1007 = vld [vmem:[#allocation2 + $0x140] sm:$0xff]
        %v1008 = vld [vmem:[#allocation2 + $0x148] sm:$0xff]
        %v1009 = vld [vmem:[#allocation2 + $0x150] sm:$0xff]
        %v1010 = vld [vmem:[#allocation2 + $0x158] sm:$0xff]
        %v1011 = vld [vmem:[#allocation2 + $0x160] sm:$0xff]
        %v1012 = vld [vmem:[#allocation2 + $0x168] sm:$0xff]
        %v1013 = vld [vmem:[#allocation2 + $0x170] sm:$0xff]
        %v1014 = vld [vmem:[#allocation2 + $0x178] sm:$0xff]
        %v1015 = vld [vmem:[#allocation2 + $0x180] sm:$0xff]
        %v1016 = vld [vmem:[#allocation2 + $0x188] sm:$0xff]
        %v1017 = vld [vmem:[#allocation2 + $0x190] sm:$0xff]
        %v1018 = vld [vmem:[#allocation2 + $0x198] sm:$0xff]
        %v1019 = vld [vmem:[#allocation2 + $0x1a0] sm:$0xff]
        %v1020 = vld [vmem:[#allocation2 + $0x1a8] sm:$0xff]
        %v1021 = vld [vmem:[#allocation2 + $0x1b0] sm:$0xff]
        %v1022 = vld [vmem:[#allocation2 + $0x1b8] sm:$0xff]
        %v1023 = vld [vmem:[#allocation2 + $0x1c0] sm:$0xff]
        %v1024 = vld [vmem:[#allocation2 + $0x1c8] sm:$0xff]
        %v1025 = vld [vmem:[#allocation2 + $0x1d0] sm:$0xff]
        %v1026 = vld [vmem:[#allocation2 + $0x1d8] sm:$0xff]
        %v1027 = vld [vmem:[#allocation2 + $0x1e0] sm:$0xff]
        %v1028 = vld [vmem:[#allocation2 + $0x1e8] sm:$0xff]
        %v1029 = vld [vmem:[#allocation2 + $0x1f0] sm:$0xff]
        %v1030 = vld [vmem:[#allocation2 + $0x1f8] sm:$0xff]
        %s1031 = scalar_lea.vmem [#allocation2], 512
        %v1032 = vld [vmem:[%s1031] sm:$0xff]
        %v1033 = vld [vmem:[%s1031 + $0x8] sm:$0xff]
        %v1034 = vld [vmem:[%s1031 + $0x10] sm:$0xff]
        %v1035 = vld [vmem:[%s1031 + $0x18] sm:$0xff]
        %v1036 = vld [vmem:[%s1031 + $0x20] sm:$0xff]
        %v1037 = vld [vmem:[%s1031 + $0x28] sm:$0xff]
        %v1038 = vld [vmem:[%s1031 + $0x30] sm:$0xff]
        %v1039 = vld [vmem:[%s1031 + $0x38] sm:$0xff]
        %v1040 = vld [vmem:[%s1031 + $0x40] sm:$0xff]
        %v1041 = vld [vmem:[%s1031 + $0x48] sm:$0xff]
        %v1042 = vld [vmem:[%s1031 + $0x50] sm:$0xff]
        %v1043 = vld [vmem:[%s1031 + $0x58] sm:$0xff]
        %v1044 = vld [vmem:[%s1031 + $0x60] sm:$0xff]
        %v1045 = vld [vmem:[%s1031 + $0x68] sm:$0xff]
        %v1046 = vld [vmem:[%s1031 + $0x70] sm:$0xff]
        %v1047 = vld [vmem:[%s1031 + $0x78] sm:$0xff]
        %v1048 = vld [vmem:[%s1031 + $0x80] sm:$0xff]
        %v1049 = vld [vmem:[%s1031 + $0x88] sm:$0xff]
        %v1050 = vld [vmem:[%s1031 + $0x90] sm:$0xff]
        %v1051 = vld [vmem:[%s1031 + $0x98] sm:$0xff]
        %v1052 = vld [vmem:[%s1031 + $0xa0] sm:$0xff]
        %v1053 = vld [vmem:[%s1031 + $0xa8] sm:$0xff]
        %v1054 = vld [vmem:[%s1031 + $0xb0] sm:$0xff]
        %v1055 = vld [vmem:[%s1031 + $0xb8] sm:$0xff]
        %v1056 = vld [vmem:[%s1031 + $0xc0] sm:$0xff]
        %v1057 = vld [vmem:[%s1031 + $0xc8] sm:$0xff]
        %v1058 = vld [vmem:[%s1031 + $0xd0] sm:$0xff]
        %v1059 = vld [vmem:[%s1031 + $0xd8] sm:$0xff]
        %v1060 = vld [vmem:[%s1031 + $0xe0] sm:$0xff]
        %v1061 = vld [vmem:[%s1031 + $0xe8] sm:$0xff]
        %v1062 = vld [vmem:[%s1031 + $0xf0] sm:$0xff]
        %v1063 = vld [vmem:[%s1031 + $0xf8] sm:$0xff]
        %v1064 = vld [vmem:[%s1031 + $0x100] sm:$0xff]
        %v1065 = vld [vmem:[%s1031 + $0x108] sm:$0xff]
        %v1066 = vld [vmem:[%s1031 + $0x110] sm:$0xff]
        %v1067 = vld [vmem:[%s1031 + $0x118] sm:$0xff]
        %v1068 = vld [vmem:[%s1031 + $0x120] sm:$0xff]
        %v1069 = vld [vmem:[%s1031 + $0x128] sm:$0xff]
        %v1070 = vld [vmem:[%s1031 + $0x130] sm:$0xff]
        %v1071 = vld [vmem:[%s1031 + $0x138] sm:$0xff]
        %v1072 = vld [vmem:[%s1031 + $0x140] sm:$0xff]
        %v1073 = vld [vmem:[%s1031 + $0x148] sm:$0xff]
        %v1074 = vld [vmem:[%s1031 + $0x150] sm:$0xff]
        %v1075 = vld [vmem:[%s1031 + $0x158] sm:$0xff]
        %v1076 = vld [vmem:[%s1031 + $0x160] sm:$0xff]
        %v1077 = vld [vmem:[%s1031 + $0x168] sm:$0xff]
        %v1078 = vld [vmem:[%s1031 + $0x170] sm:$0xff]
        %v1079 = vld [vmem:[%s1031 + $0x178] sm:$0xff]
        %v1080 = vld [vmem:[%s1031 + $0x180] sm:$0xff]
        %v1081 = vld [vmem:[%s1031 + $0x188] sm:$0xff]
        %v1082 = vld [vmem:[%s1031 + $0x190] sm:$0xff]
        %v1083 = vld [vmem:[%s1031 + $0x198] sm:$0xff]
        %v1084 = vld [vmem:[%s1031 + $0x1a0] sm:$0xff]
        %v1085 = vld [vmem:[%s1031 + $0x1a8] sm:$0xff]
        %v1086 = vld [vmem:[%s1031 + $0x1b0] sm:$0xff]
        %v1087 = vld [vmem:[%s1031 + $0x1b8] sm:$0xff]
        %v1088 = vld [vmem:[%s1031 + $0x1c0] sm:$0xff]
        %v1089 = vld [vmem:[%s1031 + $0x1c8] sm:$0xff]
        %v1090 = vld [vmem:[%s1031 + $0x1d0] sm:$0xff]
        %v1091 = vld [vmem:[%s1031 + $0x1d8] sm:$0xff]
        %v1092 = vld [vmem:[%s1031 + $0x1e0] sm:$0xff]
        %v1093 = vld [vmem:[%s1031 + $0x1e8] sm:$0xff]
        %v1094 = vld [vmem:[%s1031 + $0x1f0] sm:$0xff]
        %v1095 = vld [vmem:[%s1031 + $0x1f8] sm:$0xff]
        %s1096 = scalar_lea.vmem [#allocation2], 1024
        %v1097 = vld [vmem:[%s1096] sm:$0xff]
        %v1098 = vld [vmem:[%s1096 + $0x8] sm:$0xff]
        %v1099 = vld [vmem:[%s1096 + $0x10] sm:$0xff]
        %v1100 = vld [vmem:[%s1096 + $0x18] sm:$0xff]
        %v1101 = vld [vmem:[%s1096 + $0x20] sm:$0xff]
        %v1102 = vld [vmem:[%s1096 + $0x28] sm:$0xff]
        %v1103 = vld [vmem:[%s1096 + $0x30] sm:$0xff]
        %v1104 = vld [vmem:[%s1096 + $0x38] sm:$0xff]
        %v1105 = vld [vmem:[%s1096 + $0x40] sm:$0xff]
        %v1106 = vld [vmem:[%s1096 + $0x48] sm:$0xff]
        %v1107 = vld [vmem:[%s1096 + $0x50] sm:$0xff]
        %v1108 = vld [vmem:[%s1096 + $0x58] sm:$0xff]
        %v1109 = vld [vmem:[%s1096 + $0x60] sm:$0xff]
        %v1110 = vld [vmem:[%s1096 + $0x68] sm:$0xff]
        %v1111 = vld [vmem:[%s1096 + $0x70] sm:$0xff]
        %v1112 = vld [vmem:[%s1096 + $0x78] sm:$0xff]
        %v1113 = vld [vmem:[%s1096 + $0x80] sm:$0xff]
        %v1114 = vld [vmem:[%s1096 + $0x88] sm:$0xff]
        %v1115 = vld [vmem:[%s1096 + $0x90] sm:$0xff]
        %v1116 = vld [vmem:[%s1096 + $0x98] sm:$0xff]
        %v1117 = vld [vmem:[%s1096 + $0xa0] sm:$0xff]
        %v1118 = vld [vmem:[%s1096 + $0xa8] sm:$0xff]
        %v1119 = vld [vmem:[%s1096 + $0xb0] sm:$0xff]
        %v1120 = vld [vmem:[%s1096 + $0xb8] sm:$0xff]
        %v1121 = vld [vmem:[%s1096 + $0xc0] sm:$0xff]
        %v1122 = vld [vmem:[%s1096 + $0xc8] sm:$0xff]
        %v1123 = vld [vmem:[%s1096 + $0xd0] sm:$0xff]
        %v1124 = vld [vmem:[%s1096 + $0xd8] sm:$0xff]
        %v1125 = vld [vmem:[%s1096 + $0xe0] sm:$0xff]
        %v1126 = vld [vmem:[%s1096 + $0xe8] sm:$0xff]
        %v1127 = vld [vmem:[%s1096 + $0xf0] sm:$0xff]
        %v1128 = vld [vmem:[%s1096 + $0xf8] sm:$0xff]
        %v1129 = vld [vmem:[%s1096 + $0x100] sm:$0xff]
        %v1130 = vld [vmem:[%s1096 + $0x108] sm:$0xff]
        %v1131 = vld [vmem:[%s1096 + $0x110] sm:$0xff]
        %v1132 = vld [vmem:[%s1096 + $0x118] sm:$0xff]
        %v1133 = vld [vmem:[%s1096 + $0x120] sm:$0xff]
        %v1134 = vld [vmem:[%s1096 + $0x128] sm:$0xff]
        %v1135 = vld [vmem:[%s1096 + $0x130] sm:$0xff]
        %v1136 = vld [vmem:[%s1096 + $0x138] sm:$0xff]
        %v1137 = vld [vmem:[%s1096 + $0x140] sm:$0xff]
        %v1138 = vld [vmem:[%s1096 + $0x148] sm:$0xff]
        %v1139 = vld [vmem:[%s1096 + $0x150] sm:$0xff]
        %v1140 = vld [vmem:[%s1096 + $0x158] sm:$0xff]
        %v1141 = vld [vmem:[%s1096 + $0x160] sm:$0xff]
        %v1142 = vld [vmem:[%s1096 + $0x168] sm:$0xff]
        %v1143 = vld [vmem:[%s1096 + $0x170] sm:$0xff]
        %v1144 = vld [vmem:[%s1096 + $0x178] sm:$0xff]
        %v1145 = vld [vmem:[%s1096 + $0x180] sm:$0xff]
        %v1146 = vld [vmem:[%s1096 + $0x188] sm:$0xff]
        %v1147 = vld [vmem:[%s1096 + $0x190] sm:$0xff]
        %v1148 = vld [vmem:[%s1096 + $0x198] sm:$0xff]
        %v1149 = vld [vmem:[%s1096 + $0x1a0] sm:$0xff]
        %v1150 = vld [vmem:[%s1096 + $0x1a8] sm:$0xff]
        %v1151 = vld [vmem:[%s1096 + $0x1b0] sm:$0xff]
        %v1152 = vld [vmem:[%s1096 + $0x1b8] sm:$0xff]
        %v1153 = vld [vmem:[%s1096 + $0x1c0] sm:$0xff]
        %v1154 = vld [vmem:[%s1096 + $0x1c8] sm:$0xff]
        %v1155 = vld [vmem:[%s1096 + $0x1d0] sm:$0xff]
        %v1156 = vld [vmem:[%s1096 + $0x1d8] sm:$0xff]
        %v1157 = vld [vmem:[%s1096 + $0x1e0] sm:$0xff]
        %v1158 = vld [vmem:[%s1096 + $0x1e8] sm:$0xff]
        %v1159 = vld [vmem:[%s1096 + $0x1f0] sm:$0xff]
        %v1160 = vld [vmem:[%s1096 + $0x1f8] sm:$0xff]
        %s1161 = scalar_lea.vmem %s3, 1
        %v1162 = vld [vmem:[%s1161] ss:$2 sm:$0x3]
        %v1163 = vrot.slane %v947, 7
        %v1164 = vrot.slane %v948, 7
        %v1165 = vrot.slane %v949, 7
        %v1166 = vrot.slane %v950, 7
        %v1167 = vrot.slane %v951, 7
        %v1168 = vrot.slane %v952, 7
        %v1169 = vrot.slane %v953, 7
        %v1170 = vrot.slane %v954, 7
        %v1171 = vrot.slane %v955, 7
        %v1172 = vrot.slane %v956, 7
        %v1173 = vrot.slane %v957, 7
        %v1174 = vrot.slane %v958, 7
        %v1175 = vrot.slane %v959, 7
        %v1176 = vrot.slane %v960, 7
        %v1177 = vrot.slane %v961, 7
        %v1178 = vrot.slane %v962, 7
        %v1179 = vrot.slane %v963, 7
        %v1180 = vrot.slane %v964, 7
        %v1181 = vrot.slane %v965, 7
        %v1182 = vrot.slane %v966, 7
        %v1183 = vsel %vm328, %v1179, %v1181
        %v1184 = vsel %vm328, %v1180, %v1182
        %v1185 = vsel %vm328, %v1177, %v1179
        %v1186 = vsel %vm328, %v1178, %v1180
        %v1187 = vsel %vm328, %v1175, %v1177
        %v1188 = vsel %vm328, %v1176, %v1178
        %v1189 = vsel %vm328, %v1173, %v1175
        %v1190 = vsel %vm328, %v1174, %v1176
        %v1191 = vsel %vm328, %v1171, %v1173
        %v1192 = vsel %vm328, %v1172, %v1174
        %v1193 = vsel %vm328, %v1169, %v1171
        %v1194 = vsel %vm328, %v1170, %v1172
        %v1195 = vsel %vm328, %v1167, %v1169
        %v1196 = vsel %vm328, %v1168, %v1170
        %v1197 = vsel %vm328, %v1165, %v1167
        %v1198 = vsel %vm328, %v1166, %v1168
        %v1199 = vsel %vm328, %v1163, %v1165
        %v1200 = vsel %vm328, %v1164, %v1166
        %v1201 = vsel %vm328, %v1181, %v1163
        %v1202 = vsel %vm328, %v1182, %v1164
        %1203 = vmatprep.subr.mxu0 %v1033
        %1204 = vmatpush1.msra.mxu0 %v1032
        %1205 = vmatprep.subr.mxu0 %v1035
        %1206 = vmatpush1.msra.mxu0 %v1034
        %1207 = vmatprep.subr.mxu0 %v1037
        %1208 = vmatpush1.msra.mxu0 %v1036
        %1209 = vmatprep.subr.mxu0 %v1039
        %1210 = vmatpush1.msra.mxu0 %v1038
        %1211 = vmatprep.subr.mxu0 %v1041
        %1212 = vmatpush1.msra.mxu0 %v1040
        %1213 = vmatprep.subr.mxu0 %v1043
        %1214 = vmatpush1.msra.mxu0 %v1042
        %1215 = vmatprep.subr.mxu0 %v1045
        %1216 = vmatpush1.msra.mxu0 %v1044
        %1217 = vmatprep.subr.mxu0 %v1047
        %1218 = vmatpush1.msra.mxu0 %v1046
        %1219 = vmatprep.subr.mxu0 %v1049
        %1220 = vmatpush1.msra.mxu0 %v1048
        %1221 = vmatprep.subr.mxu0 %v1051
        %1222 = vmatpush1.msra.mxu0 %v1050
        %1223 = vmatprep.subr.mxu0 %v1053
        %1224 = vmatpush1.msra.mxu0 %v1052
        %1225 = vmatprep.subr.mxu0 %v1055
        %1226 = vmatpush1.msra.mxu0 %v1054
        %1227 = vmatprep.subr.mxu0 %v1057
        %1228 = vmatpush1.msra.mxu0 %v1056
        %1229 = vmatprep.subr.mxu0 %v1059
        %1230 = vmatpush1.msra.mxu0 %v1058
        %1231 = vmatprep.subr.mxu0 %v1061
        %1232 = vmatpush1.msra.mxu0 %v1060
        %1233 = vmatprep.subr.mxu0 %v1063
        %1234 = vmatpush1.msra.mxu0 %v1062
        %1235 = vmatprep.subr.mxu0 %v1065
        %1236 = vmatpush1.msra.mxu0 %v1064
        %1237 = vmatprep.subr.mxu0 %v1067
        %1238 = vmatpush1.msra.mxu0 %v1066
        %1239 = vmatprep.subr.mxu0 %v1069
        %1240 = vmatpush1.msra.mxu0 %v1068
        %1241 = vmatprep.subr.mxu0 %v1071
        %1242 = vmatpush1.msra.mxu0 %v1070
        %1243 = vmatprep.subr.mxu0 %v1073
        %1244 = vmatpush1.msra.mxu0 %v1072
        %1245 = vmatprep.subr.mxu0 %v1075
        %1246 = vmatpush1.msra.mxu0 %v1074
        %1247 = vmatprep.subr.mxu0 %v1077
        %1248 = vmatpush1.msra.mxu0 %v1076
        %1249 = vmatprep.subr.mxu0 %v1079
        %1250 = vmatpush1.msra.mxu0 %v1078
        %1251 = vmatprep.subr.mxu0 %v1081
        %1252 = vmatpush1.msra.mxu0 %v1080
        %1253 = vmatprep.subr.mxu0 %v1083
        %1254 = vmatpush1.msra.mxu0 %v1082
        %1255 = vmatprep.subr.mxu0 %v1085
        %1256 = vmatpush1.msra.mxu0 %v1084
        %1257 = vmatprep.subr.mxu0 %v1087
        %1258 = vmatpush1.msra.mxu0 %v1086
        %1259 = vmatprep.subr.mxu0 %v1089
        %1260 = vmatpush1.msra.mxu0 %v1088
        %1261 = vmatprep.subr.mxu0 %v1091
        %1262 = vmatpush1.msra.mxu0 %v1090
        %1263 = vmatprep.subr.mxu0 %v1093
        %1264 = vmatpush1.msra.mxu0 %v1092
        %1265 = vmatprep.subr.mxu0 %v1095
        %1266 = vmatpush1.msra.mxu0 %v1094
        %1267 = vmatprep.mubr.f32.mxu0 %v948
        %1268 = vmatmul.mubr.f32.gmra.mrb[0].mxu0 %v947
        %v1269 = vpop.f32.mrb[0].mxu0
        %v1270 = vadd.f32 0.0, %v1269
        %v1271 = vpop.f32.mrb[0].mxu0
        %v1272 = vadd.f32 0.0, %v1271
        %1273 = vmatprep.mubr.f32.mxu0 %v950
        %1274 = vmatmul.mubr.f32.gmra.mrb[0].mxu0 %v949
        %v1275 = vpop.f32.mrb[0].mxu0
        %v1276 = vadd.f32 0.0, %v1275
        %v1277 = vpop.f32.mrb[0].mxu0
        %v1278 = vadd.f32 0.0, %v1277
        %1279 = vmatprep.mubr.f32.mxu0 %v952
        %1280 = vmatmul.mubr.f32.gmra.mrb[0].mxu0 %v951
        %v1281 = vpop.f32.mrb[0].mxu0
        %v1282 = vadd.f32 0.0, %v1281
        %v1283 = vpop.f32.mrb[0].mxu0
        %v1284 = vadd.f32 0.0, %v1283
        %1285 = vmatprep.mubr.f32.mxu0 %v954
        %1286 = vmatmul.mubr.f32.gmra.mrb[0].mxu0 %v953
        %v1287 = vpop.f32.mrb[0].mxu0
        %v1288 = vadd.f32 0.0, %v1287
        %v1289 = vpop.f32.mrb[0].mxu0
        %v1290 = vadd.f32 0.0, %v1289
        %1291 = vmatprep.mubr.f32.mxu0 %v956
        %1292 = vmatmul.mubr.f32.gmra.mrb[0].mxu0 %v955
        %v1293 = vpop.f32.mrb[0].mxu0
        %v1294 = vadd.f32 0.0, %v1293
        %v1295 = vpop.f32.mrb[0].mxu0
        %v1296 = vadd.f32 0.0, %v1295
        %1297 = vmatprep.mubr.f32.mxu0 %v958
        %1298 = vmatmul.mubr.f32.gmra.mrb[0].mxu0 %v957
        %v1299 = vpop.f32.mrb[0].mxu0
        %v1300 = vadd.f32 0.0, %v1299
        %v1301 = vpop.f32.mrb[0].mxu0
        %v1302 = vadd.f32 0.0, %v1301
        %1303 = vmatprep.mubr.f32.mxu0 %v960
        %1304 = vmatmul.mubr.f32.gmra.mrb[0].mxu0 %v959
        %v1305 = vpop.f32.mrb[0].mxu0
        %v1306 = vadd.f32 0.0, %v1305
        %v1307 = vpop.f32.mrb[0].mxu0
        %v1308 = vadd.f32 0.0, %v1307
        %1309 = vmatprep.mubr.f32.mxu0 %v962
        %1310 = vmatmul.mubr.f32.gmra.mrb[0].mxu0 %v961
        %v1311 = vpop.f32.mrb[0].mxu0
        %v1312 = vadd.f32 0.0, %v1311
        %v1313 = vpop.f32.mrb[0].mxu0
        %v1314 = vadd.f32 0.0, %v1313
        %1315 = vmatprep.mubr.f32.mxu0 %v964
        %1316 = vmatmul.mubr.f32.gmra.mrb[0].mxu0 %v963
        %v1317 = vpop.f32.mrb[0].mxu0
        %v1318 = vadd.f32 0.0, %v1317
        %v1319 = vpop.f32.mrb[0].mxu0
        %v1320 = vadd.f32 0.0, %v1319
        %1321 = vmatprep.mubr.f32.mxu0 %v966
        %1322 = vmatmul.mubr.f32.gmra.mrb[0].mxu0 %v965
        %v1323 = vpop.f32.mrb[0].mxu0
        %v1324 = vadd.f32 0.0, %v1323
        %v1325 = vpop.f32.mrb[0].mxu0
        %v1326 = vadd.f32 0.0, %v1325
        %1327 = vdwg.mxu0
        %1328 = vmatprep.subr.mxu0 %v968
        %1329 = vmatpush1.msra.mxu0 %v967
        %1330 = vmatprep.subr.mxu0 %v970
        %1331 = vmatpush1.msra.mxu0 %v969
        %1332 = vmatprep.subr.mxu0 %v972
        %1333 = vmatpush1.msra.mxu0 %v971
        %1334 = vmatprep.subr.mxu0 %v974
        %1335 = vmatpush1.msra.mxu0 %v973
        %1336 = vmatprep.subr.mxu0 %v976
        %1337 = vmatpush1.msra.mxu0 %v975
        %1338 = vmatprep.subr.mxu0 %v978
        %1339 = vmatpush1.msra.mxu0 %v977
        %1340 = vmatprep.subr.mxu0 %v980
        %1341 = vmatpush1.msra.mxu0 %v979
        %1342 = vmatprep.subr.mxu0 %v982
        %1343 = vmatpush1.msra.mxu0 %v981
        %1344 = vmatprep.subr.mxu0 %v984
        %1345 = vmatpush1.msra.mxu0 %v983
        %1346 = vmatprep.subr.mxu0 %v986
        %1347 = vmatpush1.msra.mxu0 %v985
        %1348 = vmatprep.subr.mxu0 %v988
        %1349 = vmatpush1.msra.mxu0 %v987
        %1350 = vmatprep.subr.mxu0 %v990
        %1351 = vmatpush1.msra.mxu0 %v989
        %1352 = vmatprep.subr.mxu0 %v992
        %1353 = vmatpush1.msra.mxu0 %v991
        %1354 = vmatprep.subr.mxu0 %v994
        %1355 = vmatpush1.msra.mxu0 %v993
        %1356 = vmatprep.subr.mxu0 %v996
        %1357 = vmatpush1.msra.mxu0 %v995
        %1358 = vmatprep.subr.mxu0 %v998
        %1359 = vmatpush1.msra.mxu0 %v997
        %1360 = vmatprep.subr.mxu0 %v1000
        %1361 = vmatpush1.msra.mxu0 %v999
        %1362 = vmatprep.subr.mxu0 %v1002
        %1363 = vmatpush1.msra.mxu0 %v1001
        %1364 = vmatprep.subr.mxu0 %v1004
        %1365 = vmatpush1.msra.mxu0 %v1003
        %1366 = vmatprep.subr.mxu0 %v1006
        %1367 = vmatpush1.msra.mxu0 %v1005
        %1368 = vmatprep.subr.mxu0 %v1008
        %1369 = vmatpush1.msra.mxu0 %v1007
        %1370 = vmatprep.subr.mxu0 %v1010
        %1371 = vmatpush1.msra.mxu0 %v1009
        %1372 = vmatprep.subr.mxu0 %v1012
        %1373 = vmatpush1.msra.mxu0 %v1011
        %1374 = vmatprep.subr.mxu0 %v1014
        %1375 = vmatpush1.msra.mxu0 %v1013
        %1376 = vmatprep.subr.mxu0 %v1016
        %1377 = vmatpush1.msra.mxu0 %v1015
        %1378 = vmatprep.subr.mxu0 %v1018
        %1379 = vmatpush1.msra.mxu0 %v1017
        %1380 = vmatprep.subr.mxu0 %v1020
        %1381 = vmatpush1.msra.mxu0 %v1019
        %1382 = vmatprep.subr.mxu0 %v1022
        %1383 = vmatpush1.msra.mxu0 %v1021
        %1384 = vmatprep.subr.mxu0 %v1024
        %1385 = vmatpush1.msra.mxu0 %v1023
        %1386 = vmatprep.subr.mxu0 %v1026
        %1387 = vmatpush1.msra.mxu0 %v1025
        %1388 = vmatprep.subr.mxu0 %v1028
        %1389 = vmatpush1.msra.mxu0 %v1027
        %1390 = vmatprep.subr.mxu0 %v1030
        %1391 = vmatpush1.msra.mxu0 %v1029
        %1392 = vmatprep.mubr.f32.mxu0 %v1202
        %1393 = vmatmul.mubr.f32.gmra.mrb[0].mxu0 %v1201
        %v1394 = vpop.f32.mrb[0].mxu0
        %v1395 = vadd.f32 %v1270, %v1394
        %v1396 = vpop.f32.mrb[0].mxu0
        %v1397 = vadd.f32 %v1272, %v1396
        %1398 = vmatprep.mubr.f32.mxu0 %v1200
        %1399 = vmatmul.mubr.f32.gmra.mrb[0].mxu0 %v1199
        %v1400 = vpop.f32.mrb[0].mxu0
        %v1401 = vadd.f32 %v1276, %v1400
        %v1402 = vpop.f32.mrb[0].mxu0
        %v1403 = vadd.f32 %v1278, %v1402
        %1404 = vmatprep.mubr.f32.mxu0 %v1198
        %1405 = vmatmul.mubr.f32.gmra.mrb[0].mxu0 %v1197
        %v1406 = vpop.f32.mrb[0].mxu0
        %v1407 = vadd.f32 %v1282, %v1406
        %v1408 = vpop.f32.mrb[0].mxu0
        %v1409 = vadd.f32 %v1284, %v1408
        %1410 = vmatprep.mubr.f32.mxu0 %v1196
        %1411 = vmatmul.mubr.f32.gmra.mrb[0].mxu0 %v1195
        %v1412 = vpop.f32.mrb[0].mxu0
        %v1413 = vadd.f32 %v1288, %v1412
        %v1414 = vpop.f32.mrb[0].mxu0
        %v1415 = vadd.f32 %v1290, %v1414
        %1416 = vmatprep.mubr.f32.mxu0 %v1194
        %1417 = vmatmul.mubr.f32.gmra.mrb[0].mxu0 %v1193
        %v1418 = vpop.f32.mrb[0].mxu0
        %v1419 = vadd.f32 %v1294, %v1418
        %v1420 = vpop.f32.mrb[0].mxu0
        %v1421 = vadd.f32 %v1296, %v1420
        %1422 = vmatprep.mubr.f32.mxu0 %v1192
        %1423 = vmatmul.mubr.f32.gmra.mrb[0].mxu0 %v1191
        %v1424 = vpop.f32.mrb[0].mxu0
        %v1425 = vadd.f32 %v1300, %v1424
        %v1426 = vpop.f32.mrb[0].mxu0
        %v1427 = vadd.f32 %v1302, %v1426
        %1428 = vmatprep.mubr.f32.mxu0 %v1190
        %1429 = vmatmul.mubr.f32.gmra.mrb[0].mxu0 %v1189
        %v1430 = vpop.f32.mrb[0].mxu0
        %v1431 = vadd.f32 %v1306, %v1430
        %v1432 = vpop.f32.mrb[0].mxu0
        %v1433 = vadd.f32 %v1308, %v1432
        %1434 = vmatprep.mubr.f32.mxu0 %v1188
        %1435 = vmatmul.mubr.f32.gmra.mrb[0].mxu0 %v1187
        %v1436 = vpop.f32.mrb[0].mxu0
        %v1437 = vadd.f32 %v1312, %v1436
        %v1438 = vpop.f32.mrb[0].mxu0
        %v1439 = vadd.f32 %v1314, %v1438
        %1440 = vmatprep.mubr.f32.mxu0 %v1186
        %1441 = vmatmul.mubr.f32.gmra.mrb[0].mxu0 %v1185
        %v1442 = vpop.f32.mrb[0].mxu0
        %v1443 = vadd.f32 %v1318, %v1442
        %v1444 = vpop.f32.mrb[0].mxu0
        %v1445 = vadd.f32 %v1320, %v1444
        %1446 = vmatprep.mubr.f32.mxu0 %v1184
        %1447 = vmatmul.mubr.f32.gmra.mrb[0].mxu0 %v1183
        %v1448 = vpop.f32.mrb[0].mxu0
        %v1449 = vadd.f32 %v1324, %v1448
        %v1450 = vpop.f32.mrb[0].mxu0
        %v1451 = vadd.f32 %v1326, %v1450
        %1452 = vdwg.mxu0
        %v1453 = vrot.slane %v947, 1
        %v1454 = vrot.slane %v948, 1
        %v1455 = vrot.slane %v949, 1
        %v1456 = vrot.slane %v950, 1
        %v1457 = vrot.slane %v951, 1
        %v1458 = vrot.slane %v952, 1
        %v1459 = vrot.slane %v953, 1
        %v1460 = vrot.slane %v954, 1
        %v1461 = vrot.slane %v955, 1
        %v1462 = vrot.slane %v956, 1
        %v1463 = vrot.slane %v957, 1
        %v1464 = vrot.slane %v958, 1
        %v1465 = vrot.slane %v959, 1
        %v1466 = vrot.slane %v960, 1
        %v1467 = vrot.slane %v961, 1
        %v1468 = vrot.slane %v962, 1
        %v1469 = vrot.slane %v963, 1
        %v1470 = vrot.slane %v964, 1
        %v1471 = vrot.slane %v965, 1
        %v1472 = vrot.slane %v966, 1
        %v1473 = vsel %vm660, %v1469, %v1471
        %v1474 = vsel %vm660, %v1470, %v1472
        %v1475 = vsel %vm660, %v1467, %v1469
        %v1476 = vsel %vm660, %v1468, %v1470
        %v1477 = vsel %vm660, %v1465, %v1467
        %v1478 = vsel %vm660, %v1466, %v1468
        %v1479 = vsel %vm660, %v1463, %v1465
        %v1480 = vsel %vm660, %v1464, %v1466
        %v1481 = vsel %vm660, %v1461, %v1463
        %v1482 = vsel %vm660, %v1462, %v1464
        %v1483 = vsel %vm660, %v1459, %v1461
        %v1484 = vsel %vm660, %v1460, %v1462
        %v1485 = vsel %vm660, %v1457, %v1459
        %v1486 = vsel %vm660, %v1458, %v1460
        %v1487 = vsel %vm660, %v1455, %v1457
        %v1488 = vsel %vm660, %v1456, %v1458
        %v1489 = vsel %vm660, %v1453, %v1455
        %v1490 = vsel %vm660, %v1454, %v1456
        %v1491 = vsel %vm660, %v1471, %v1453
        %v1492 = vsel %vm660, %v1472, %v1454
        %1493 = vmatprep.subr.mxu0 %v1098
        %1494 = vmatpush1.msra.mxu0 %v1097
        %1495 = vmatprep.subr.mxu0 %v1100
        %1496 = vmatpush1.msra.mxu0 %v1099
        %1497 = vmatprep.subr.mxu0 %v1102
        %1498 = vmatpush1.msra.mxu0 %v1101
        %1499 = vmatprep.subr.mxu0 %v1104
        %1500 = vmatpush1.msra.mxu0 %v1103
        %1501 = vmatprep.subr.mxu0 %v1106
        %1502 = vmatpush1.msra.mxu0 %v1105
        %1503 = vmatprep.subr.mxu0 %v1108
        %1504 = vmatpush1.msra.mxu0 %v1107
        %1505 = vmatprep.subr.mxu0 %v1110
        %1506 = vmatpush1.msra.mxu0 %v1109
        %1507 = vmatprep.subr.mxu0 %v1112
        %1508 = vmatpush1.msra.mxu0 %v1111
        %1509 = vmatprep.subr.mxu0 %v1114
        %1510 = vmatpush1.msra.mxu0 %v1113
        %1511 = vmatprep.subr.mxu0 %v1116
        %1512 = vmatpush1.msra.mxu0 %v1115
        %1513 = vmatprep.subr.mxu0 %v1118
        %1514 = vmatpush1.msra.mxu0 %v1117
        %1515 = vmatprep.subr.mxu0 %v1120
        %1516 = vmatpush1.msra.mxu0 %v1119
        %1517 = vmatprep.subr.mxu0 %v1122
        %1518 = vmatpush1.msra.mxu0 %v1121
        %1519 = vmatprep.subr.mxu0 %v1124
        %1520 = vmatpush1.msra.mxu0 %v1123
        %1521 = vmatprep.subr.mxu0 %v1126
        %1522 = vmatpush1.msra.mxu0 %v1125
        %1523 = vmatprep.subr.mxu0 %v1128
        %1524 = vmatpush1.msra.mxu0 %v1127
        %1525 = vmatprep.subr.mxu0 %v1130
        %1526 = vmatpush1.msra.mxu0 %v1129
        %1527 = vmatprep.subr.mxu0 %v1132
        %1528 = vmatpush1.msra.mxu0 %v1131
        %1529 = vmatprep.subr.mxu0 %v1134
        %1530 = vmatpush1.msra.mxu0 %v1133
        %1531 = vmatprep.subr.mxu0 %v1136
        %1532 = vmatpush1.msra.mxu0 %v1135
        %1533 = vmatprep.subr.mxu0 %v1138
        %1534 = vmatpush1.msra.mxu0 %v1137
        %1535 = vmatprep.subr.mxu0 %v1140
        %1536 = vmatpush1.msra.mxu0 %v1139
        %1537 = vmatprep.subr.mxu0 %v1142
        %1538 = vmatpush1.msra.mxu0 %v1141
        %1539 = vmatprep.subr.mxu0 %v1144
        %1540 = vmatpush1.msra.mxu0 %v1143
        %1541 = vmatprep.subr.mxu0 %v1146
        %1542 = vmatpush1.msra.mxu0 %v1145
        %1543 = vmatprep.subr.mxu0 %v1148
        %1544 = vmatpush1.msra.mxu0 %v1147
        %1545 = vmatprep.subr.mxu0 %v1150
        %1546 = vmatpush1.msra.mxu0 %v1149
        %1547 = vmatprep.subr.mxu0 %v1152
        %1548 = vmatpush1.msra.mxu0 %v1151
        %1549 = vmatprep.subr.mxu0 %v1154
        %1550 = vmatpush1.msra.mxu0 %v1153
        %1551 = vmatprep.subr.mxu0 %v1156
        %1552 = vmatpush1.msra.mxu0 %v1155
        %1553 = vmatprep.subr.mxu0 %v1158
        %1554 = vmatpush1.msra.mxu0 %v1157
        %1555 = vmatprep.subr.mxu0 %v1160
        %1556 = vmatpush1.msra.mxu0 %v1159
        %1557 = vmatprep.mubr.f32.mxu0 %v1490
        %1558 = vmatmul.mubr.f32.gmra.mrb[0].mxu0 %v1489
        %v1559 = vpop.f32.mrb[0].mxu0
        %v1560 = vadd.f32 0.0, %v1559
        %v1561 = vpop.f32.mrb[0].mxu0
        %v1562 = vadd.f32 0.0, %v1561
        %1563 = vmatprep.mubr.f32.mxu0 %v1488
        %1564 = vmatmul.mubr.f32.gmra.mrb[0].mxu0 %v1487
        %v1565 = vpop.f32.mrb[0].mxu0
        %v1566 = vadd.f32 0.0, %v1565
        %v1567 = vpop.f32.mrb[0].mxu0
        %v1568 = vadd.f32 0.0, %v1567
        %1569 = vmatprep.mubr.f32.mxu0 %v1486
        %1570 = vmatmul.mubr.f32.gmra.mrb[0].mxu0 %v1485
        %v1571 = vpop.f32.mrb[0].mxu0
        %v1572 = vadd.f32 0.0, %v1571
        %v1573 = vpop.f32.mrb[0].mxu0
        %v1574 = vadd.f32 0.0, %v1573
        %1575 = vmatprep.mubr.f32.mxu0 %v1484
        %1576 = vmatmul.mubr.f32.gmra.mrb[0].mxu0 %v1483
        %v1577 = vpop.f32.mrb[0].mxu0
        %v1578 = vadd.f32 0.0, %v1577
        %v1579 = vpop.f32.mrb[0].mxu0
        %v1580 = vadd.f32 0.0, %v1579
        %1581 = vmatprep.mubr.f32.mxu0 %v1482
        %1582 = vmatmul.mubr.f32.gmra.mrb[0].mxu0 %v1481
        %v1583 = vpop.f32.mrb[0].mxu0
        %v1584 = vadd.f32 0.0, %v1583
        %v1585 = vpop.f32.mrb[0].mxu0
        %v1586 = vadd.f32 0.0, %v1585
        %1587 = vmatprep.mubr.f32.mxu0 %v1480
        %1588 = vmatmul.mubr.f32.gmra.mrb[0].mxu0 %v1479
        %v1589 = vpop.f32.mrb[0].mxu0
        %v1590 = vadd.f32 0.0, %v1589
        %v1591 = vpop.f32.mrb[0].mxu0
        %v1592 = vadd.f32 0.0, %v1591
        %1593 = vmatprep.mubr.f32.mxu0 %v1478
        %1594 = vmatmul.mubr.f32.gmra.mrb[0].mxu0 %v1477
        %v1595 = vpop.f32.mrb[0].mxu0
        %v1596 = vadd.f32 0.0, %v1595
        %v1597 = vpop.f32.mrb[0].mxu0
        %v1598 = vadd.f32 0.0, %v1597
        %1599 = vmatprep.mubr.f32.mxu0 %v1476
        %1600 = vmatmul.mubr.f32.gmra.mrb[0].mxu0 %v1475
        %v1601 = vpop.f32.mrb[0].mxu0
        %v1602 = vadd.f32 0.0, %v1601
        %v1603 = vpop.f32.mrb[0].mxu0
        %v1604 = vadd.f32 0.0, %v1603
        %1605 = vmatprep.mubr.f32.mxu0 %v1474
        %1606 = vmatmul.mubr.f32.gmra.mrb[0].mxu0 %v1473
        %v1607 = vpop.f32.mrb[0].mxu0
        %v1608 = vadd.f32 0.0, %v1607
        %v1609 = vpop.f32.mrb[0].mxu0
        %v1610 = vadd.f32 0.0, %v1609
        %1611 = vmatprep.mubr.f32.mxu0 %v1492
        %1612 = vmatmul.mubr.f32.gmra.mrb[0].mxu0 %v1491
        %v1613 = vpop.f32.mrb[0].mxu0
        %v1614 = vadd.f32 0.0, %v1613
        %v1615 = vpop.f32.mrb[0].mxu0
        %v1616 = vadd.f32 0.0, %v1615
        %1617 = vdwg.mxu0
        %v1618 = vadd.f32 %v1395, %v1560
        %v1619 = vadd.f32 %v1397, %v1562
        %v1620 = vadd.f32 %v1401, %v1566
        %v1621 = vadd.f32 %v1403, %v1568
        %v1622 = vadd.f32 %v1407, %v1572
        %v1623 = vadd.f32 %v1409, %v1574
        %v1624 = vadd.f32 %v1413, %v1578
        %v1625 = vadd.f32 %v1415, %v1580
        %v1626 = vadd.f32 %v1419, %v1584
        %v1627 = vadd.f32 %v1421, %v1586
        %v1628 = vadd.f32 %v1425, %v1590
        %v1629 = vadd.f32 %v1427, %v1592
        %v1630 = vadd.f32 %v1431, %v1596
        %v1631 = vadd.f32 %v1433, %v1598
        %v1632 = vadd.f32 %v1437, %v1602
        %v1633 = vadd.f32 %v1439, %v1604
        %v1634 = vadd.f32 %v1443, %v1608
        %v1635 = vadd.f32 %v1445, %v1610
        %v1636 = vadd.f32 %v1449, %v1614
        %v1637 = vadd.f32 %v1451, %v1616
        %v1639 = vlaneseq
        %v1640 = vshrl.u32 %v1639, 7
        %v1641 = vsub.s32 0, %v1640
        %v1642 = vrot.slane %v1162, %v1641
        %v1643 = vlaneseq
        %v1644 = vshrl.u32 %v1643, 7
        %v1645 = vsub.s32 1, %v1644
        %v1646 = vrot.slane %v1162, %v1645
        %v1649 = vadd.f32 %v1618, %v1642
        %v1650 = vadd.f32 %v1619, %v1646
        %v1651 = vadd.f32 %v1620, %v1642
        %v1652 = vadd.f32 %v1621, %v1646
        %v1653 = vadd.f32 %v1622, %v1642
        %v1654 = vadd.f32 %v1623, %v1646
        %v1655 = vadd.f32 %v1624, %v1642
        %v1656 = vadd.f32 %v1625, %v1646
        %v1657 = vadd.f32 %v1626, %v1642
        %v1658 = vadd.f32 %v1627, %v1646
        %v1659 = vadd.f32 %v1628, %v1642
        %v1660 = vadd.f32 %v1629, %v1646
        %v1661 = vadd.f32 %v1630, %v1642
        %v1662 = vadd.f32 %v1631, %v1646
        %v1663 = vadd.f32 %v1632, %v1642
        %v1664 = vadd.f32 %v1633, %v1646
        %v1665 = vadd.f32 %v1634, %v1642
        %v1666 = vadd.f32 %v1635, %v1646
        %v1667 = vadd.f32 %v1636, %v1642
        %v1668 = vadd.f32 %v1637, %v1646
        %v1669 = vmax.f32 %v1649, 0.0
        %v1670 = vmax.f32 %v1650, 0.0
        %v1671 = vmax.f32 %v1651, 0.0
        %v1672 = vmax.f32 %v1652, 0.0
        %v1673 = vmax.f32 %v1653, 0.0
        %v1674 = vmax.f32 %v1654, 0.0
        %v1675 = vmax.f32 %v1655, 0.0
        %v1676 = vmax.f32 %v1656, 0.0
        %v1677 = vmax.f32 %v1657, 0.0
        %v1678 = vmax.f32 %v1658, 0.0
        %v1679 = vmax.f32 %v1659, 0.0
        %v1680 = vmax.f32 %v1660, 0.0
        %v1681 = vmax.f32 %v1661, 0.0
        %v1682 = vmax.f32 %v1662, 0.0
        %v1683 = vmax.f32 %v1663, 0.0
        %v1684 = vmax.f32 %v1664, 0.0
        %v1685 = vmax.f32 %v1665, 0.0
        %v1686 = vmax.f32 %v1666, 0.0
        %v1687 = vmax.f32 %v1667, 0.0
        %v1688 = vmax.f32 %v1668, 0.0
        %v1689 = vmul.f32 %v1669, %v900
        %v1690 = vmul.f32 %v1670, %v900
        %v1691 = vmul.f32 %v1671, %v905
        %v1692 = vmul.f32 %v1672, %v905
        %v1693 = vmul.f32 %v1673, %v910
        %v1694 = vmul.f32 %v1674, %v910
        %v1695 = vmul.f32 %v1675, %v915
        %v1696 = vmul.f32 %v1676, %v915
        %v1697 = vmul.f32 %v1677, %v920
        %v1698 = vmul.f32 %v1678, %v920
        %v1699 = vmul.f32 %v1679, %v925
        %v1700 = vmul.f32 %v1680, %v925
        %v1701 = vmul.f32 %v1681, %v930
        %v1702 = vmul.f32 %v1682, %v930
        %v1703 = vmul.f32 %v1683, %v935
        %v1704 = vmul.f32 %v1684, %v935
        %v1705 = vmul.f32 %v1685, %v940
        %v1706 = vmul.f32 %v1686, %v940
        %v1707 = vmul.f32 %v1687, %v945
        %v1708 = vmul.f32 %v1688, %v945
        %1709 = vst [vmem:[%s243] sm:$0xff] %v1689
        %1710 = vst [vmem:[%s243 + $0x8] sm:$0xff] %v1690
        %1711 = vst [vmem:[%s243 + $0x10] sm:$0xff] %v1691
        %1712 = vst [vmem:[%s243 + $0x18] sm:$0xff] %v1692
        %1713 = vst [vmem:[%s243 + $0x20] sm:$0xff] %v1693
        %1714 = vst [vmem:[%s243 + $0x28] sm:$0xff] %v1694
        %1715 = vst [vmem:[%s243 + $0x30] sm:$0xff] %v1695
        %1716 = vst [vmem:[%s243 + $0x38] sm:$0xff] %v1696
        %1717 = vst [vmem:[%s243 + $0x40] sm:$0xff] %v1697
        %1718 = vst [vmem:[%s243 + $0x48] sm:$0xff] %v1698
        %1719 = vst [vmem:[%s243 + $0x50] sm:$0xff] %v1699
        %1720 = vst [vmem:[%s243 + $0x58] sm:$0xff] %v1700
        %1721 = vst [vmem:[%s243 + $0x60] sm:$0xff] %v1701
        %1722 = vst [vmem:[%s243 + $0x68] sm:$0xff] %v1702
        %1723 = vst [vmem:[%s243 + $0x70] sm:$0xff] %v1703
        %1724 = vst [vmem:[%s243 + $0x78] sm:$0xff] %v1704
        %1725 = vst [vmem:[%s243 + $0x80] sm:$0xff] %v1705
        %1726 = vst [vmem:[%s243 + $0x88] sm:$0xff] %v1706
        %1727 = vst [vmem:[%s243 + $0x90] sm:$0xff] %v1707
        %1728 = vst [vmem:[%s243 + $0x98] sm:$0xff] %v1708
        %s1729 = smul.u32 10, %s17
        %p1730 = scmp.lt.s32.totalorder %s1729, 19
        %s1731 = scalar_select %p1730, %s1729, 19
        %s1732 = smul.addr %s1731, 2
        %s1733 = smul.addr %s1732, 8
        %s1734 = scalar_lea.vmem %s5, %s1733
        // Predicated region
        $region45: #{deconv_block_forward.1} parent=39 // pred_check
          %p1735 = pneg %p145
        $region46: #{deconv_block_forward.1} parent=39 // pred_check_branch
          %1737 = sbr.rel (%p1735) target = $region48
        $region47: #{deconv_block_forward.1} parent=39 // pred_region
          %s1738 = smul.u32 10, %s17
        $region48: #{deconv_block_forward.1} parent=39 // pred_fallthru
          _
      $region40: #{deconv_block_forward.1} parent=5 // pred_fallthru
        _
      %p1739 = scmp.le.s32.totalorder 2, %s12
      // Predicated region
      $region49: #{deconv_block_forward.1} parent=5 // pred_check
        %p1740 = pneg %p1739
      $region50: #{deconv_block_forward.1} parent=5 // pred_check_branch
        %1742 = sbr.rel (%p1740) target = $region52
      $region51: #{deconv_block_forward.1} parent=5 // pred_region
        %s1743 = ssub.s32 %s12, 2
        // Predicated region
        $region53: #{deconv_block_forward.1} parent=51 // pred_check
          %p1744 = pneg %p151
        $region54: #{deconv_block_forward.1} parent=51 // pred_check_branch
          %1746 = sbr.rel (%p1744) target = $region56
        $region55: #{deconv_block_forward.1} parent=51 // pred_region
          %s1747 = smul.u32 10, %s18
          %p1748 = scmp.lt.s32.totalorder %s1747, 19
          %s1749 = scalar_select %p1748, %s1747, 19
          %s1750 = smul.addr %s1749, 2
          %s1751 = smul.addr %s1750, 8
          %s1752 = scalar_lea.vmem %s5, %s1751
        $region56: #{deconv_block_forward.1} parent=51 // pred_fallthru
          _
      $region52: #{deconv_block_forward.1} parent=5 // pred_fallthru
        _
    $region6: #{deconv_block_forward.1} parent=1 // loop_footer
      %s16 = sadd.s32 1, %s12
    $region7: #{deconv_block_forward.1} parent=1 // loop_footer_branch
      %11 = sbr.rel target = $region3
    $region8: #{deconv_block_forward.1} parent=1 // loop_exit
      _
    %1753 = vsyncpa [#allocation3], 1
    %s1754 = scalar_lea.sflag [#allocation3], 1
    %1755 = vsyncpa %s1754, 1

</llo_original>
